<compile_context>
chip_gen: v7x
topology: tpu7x:2x2x1
jax: 0.10.0
libtpu: 0.0.40
codegen_flags: <defaults>
</compile_context>

<pallas_src>
import functools

import jax
import jax.numpy as jnp
from jax import lax
from jax.experimental import pallas as pl
from jax.experimental.pallas import tpu as pltpu


# ----------------------------------------------------------------------------
# Kernel
# ----------------------------------------------------------------------------
def _lstm_fm_kernel(x_ref, wxg_ref, bias_ref, whh_ref, wout_ref, bout_ref,
                    probs_ref, hn_ref, cn_ref,
                    xg_ref, h_all_ref, h_ref, c_ref,
                    *, batch, chunk_steps, unroll, use_bf16):
    """One step-chunk of the fused LSTM forward.

    Per chunk:
      1. batched input projection (embed folded into the gate projection)
      2. serial recurrence over chunk_steps (only h@W_hh + gate math on chain)
      3. batched output projection + softmax, lane-dense 128-wide store
    (h, c) live in persistent VMEM scratch and carry across chunks.
    """
    H = whh_ref.shape[0]

    # Chunk 0: zero-init the carried LSTM state (hidden=None in the module).
    @pl.when(pl.program_id(0) == 0)
    def _init():
        h_ref[...] = jnp.zeros_like(h_ref)
        c_ref[...] = jnp.zeros_like(c_ref)

    # --- 1. Batched, MXU-filling input projection, hoisted off the recurrence.
    #        (chunk_steps*B, inputSize) @ (inputSize, 4H) + (1, 4H)
    x = x_ref[...]
    w_xg = wxg_ref[...]
    if use_bf16:        # rev #6: bf16 operands, f32 accumulation (v6e / v7x)
        x = x.astype(jnp.bfloat16)
        w_xg = w_xg.astype(jnp.bfloat16)
    xg_ref[...] = (jnp.dot(x, w_xg, preferred_element_type=jnp.float32)
                   + bias_ref[...])

    w_hh = whh_ref[...]                       # (H, 4H); recurrence stays f32

    def body(i, carry):
        h, c = carry                          # each (B, H)
        row = pl.multiple_of(i * batch, batch)
        # Only the recurrent matmul remains on the serial critical path.
        gates = xg_ref[pl.ds(row, batch), :] + jnp.dot(
            h, w_hh, preferred_element_type=jnp.float32)        # (B, 4H)
        # Activate the full 4H vreg group per nonlinearity (EUP); slice after.
        sig = jax.nn.sigmoid(gates)
        th = jnp.tanh(gates)
        i_g = sig[:, 0 * H:1 * H]
        f_g = sig[:, 1 * H:2 * H]
        g_g = th[:, 2 * H:3 * H]
        o_g = sig[:, 3 * H:4 * H]
        c_new = f_g * c + i_g * g_g
        h_new = o_g * jnp.tanh(c_new)
        h_all_ref[pl.ds(row, batch), :] = h_new   # off the dependency chain
        return (h_new, c_new)

    h_f, c_f = lax.fori_loop(0, chunk_steps, body, (h_ref[...], c_ref[...]),
                             unroll=unroll)
    h_ref[...] = h_f                          # carry to next chunk (scratch)
    c_ref[...] = c_f
    hn_ref[...] = h_f                         # resident output; last chunk wins
    cn_ref[...] = c_f

    # --- 3. Batched output projection + softmax, single lane-dense store.
    # wout/bout are pre-padded to a 128-lane multiple; padded logit lanes carry
    # a -1e30 bias so exp() underflows to 0 and the softmax is unaffected.
    h_all = h_all_ref[...]
    w_out = wout_ref[...]
    if use_bf16:
        h_all = h_all.astype(jnp.bfloat16)
        w_out = w_out.astype(jnp.bfloat16)
    logits = (jnp.dot(h_all, w_out, preferred_element_type=jnp.float32)
              + bout_ref[...])                                  # (rows, S_pad)
    m = jnp.max(logits, axis=-1, keepdims=True)
    ex = jnp.exp(logits - m)
    denom = jnp.sum(ex, axis=-1, keepdims=True)
    # Exact reciprocal (off the serial path): rows sum to 1 at f32 accuracy,
    # safe for downstream log / sampling (review correctness concern).
    probs_ref[...] = ex * pl.reciprocal(denom, approx=False)


# ----------------------------------------------------------------------------
# Wrapper helpers
# ----------------------------------------------------------------------------
def _round_up(v, m):
    return (v + m - 1) // m * m


def _tile_bytes(shape, itemsize=4):
    """Bytes of a 2D f32 buffer once padded to the (8, 128) VMEM tile."""
    r, c = shape
    return _round_up(max(r, 1), 8) * _round_up(max(c, 1), 128) * itemsize


def _choose_step_chunk(steps, batch, requested):
    def valid(c):
        return steps % c == 0 and (c == steps or (c * batch) % 8 == 0)

    if requested is not None and valid(requested):
        return requested
    # Whole sequence while the resident chunk stays small; otherwise the
    # largest valid divisor bounding the per-chunk VMEM footprint (mandatory
    # on v7x's 64 MiB VMEM for long sequences).
    if steps * batch <= 2048:
        return steps
    best = steps
    for c in range(1, steps):
        if valid(c) and c * batch <= 2048:
            best = c
    return best


def prepare_params(params, *, lane=128):
    """One-time parameter preparation (rev #9): embed folded into the LSTM
    input projection, biases merged, output projection lane-padded."""
    (w_emb_t, b_emb, w_ih_t, w_hh_t, b_ih, b_hh, w_out_t, b_out) = params
    hdim = w_hh_t.shape[0]
    state_size = w_out_t.shape[1]

    w_xg = jnp.dot(w_emb_t, w_ih_t)                       # (inputSize, 4H)
    bias_total = jnp.dot(b_emb, w_ih_t) + b_ih + b_hh     # (1, 4H)

    s_pad = max(lane, _round_up(state_size, lane))
    pad = s_pad - state_size
    if pad:
        w_out_p = jnp.concatenate(
            [w_out_t, jnp.zeros((hdim, pad), jnp.float32)], axis=1)
        b_out_p = jnp.concatenate(
            [b_out, jnp.full((1, pad), -1e30, jnp.float32)], axis=1)
    else:
        w_out_p, b_out_p = w_out_t, b_out

    return dict(w_xg=w_xg, bias=bias_total, w_hh=w_hh_t,
                w_out=w_out_p, b_out=b_out_p,
                hdim=hdim, state_size=state_size, s_pad=s_pad)


def _run_lstm_kernel(x_flat, prep, *, steps, batch, step_chunk=None,
                     unroll=None, use_bf16=False):
    """Core Pallas call. x_flat: (steps*batch, inputSize), time-major rows."""
    input_size = x_flat.shape[1]
    H = prep["hdim"]
    s_pad = prep["s_pad"]

    step_chunk = _choose_step_chunk(steps, batch, step_chunk)
    n_chunks = steps // step_chunk
    rows_c = step_chunk * batch
    rows = steps * batch

    if unroll is None:
        # rev #11: full unroll for short chunks, deeper partial unroll else.
        unroll = True if step_chunk <= 64 else 8

    kernel = functools.partial(_lstm_fm_kernel, batch=batch,
                               chunk_steps=step_chunk, unroll=unroll,
                               use_bf16=use_bf16)

    grid_spec = pltpu.PrefetchScalarGridSpec(
        num_scalar_prefetch=0,
        grid=(n_chunks,),
        in_specs=[
            pl.BlockSpec((rows_c, input_size), lambda t: (t, 0)),   # x chunk
            pl.BlockSpec((input_size, 4 * H), lambda t: (0, 0)),    # W_xg
            pl.BlockSpec((1, 4 * H), lambda t: (0, 0)),             # bias
            pl.BlockSpec((H, 4 * H), lambda t: (0, 0)),             # W_hh
            pl.BlockSpec((H, s_pad), lambda t: (0, 0)),             # W_out
            pl.BlockSpec((1, s_pad), lambda t: (0, 0)),             # b_out
        ],
        out_specs=(
            pl.BlockSpec((rows_c, s_pad), lambda t: (t, 0)),        # probs
            pl.BlockSpec((batch, H), lambda t: (0, 0)),             # h_n
            pl.BlockSpec((batch, H), lambda t: (0, 0)),             # c_n
        ),
        scratch_shapes=[
            pltpu.VMEM((rows_c, 4 * H), jnp.float32),   # xg (chunk)
            pltpu.VMEM((rows_c, H), jnp.float32),       # per-step h (chunk)
            pltpu.VMEM((batch, H), jnp.float32),        # carried h
            pltpu.VMEM((batch, H), jnp.float32),        # carried c
        ],
    )

    # rev #10: vmem limit sized from the real footprint, plus a cost estimate
    # so XLA can overlap surrounding ops with this latency-long serial kernel.
    io_bufs = [(rows_c, input_size), (input_size, 4 * H), (1, 4 * H),
               (H, 4 * H), (H, s_pad), (1, s_pad),
               (rows_c, s_pad), (batch, H), (batch, H)]
    scratch_bufs = [(rows_c, 4 * H), (rows_c, H), (batch, H), (batch, H)]
    footprint = (2 * sum(_tile_bytes(s) for s in io_bufs)
                 + sum(_tile_bytes(s) for s in scratch_bufs))
    vmem_limit = int(min(max(2 * footprint + (4 << 20), 32 << 20), 64 << 20))

    flops = 2 * rows * (input_size * 4 * H + H * 4 * H + H * s_pad)
    transcendentals = rows * (4 * H + 4 * H + H + s_pad)
    bytes_accessed = 4 * (rows * input_size + rows * s_pad + 2 * batch * H
                          + input_size * 4 * H + 4 * H + H * 4 * H
                          + H * s_pad + s_pad)
    cost = pl.CostEstimate(flops=int(flops),
                           transcendentals=int(transcendentals),
                           bytes_accessed=int(bytes_accessed))

    probs_p, hn, cn = pl.pallas_call(
        kernel,
        out_shape=(
            jax.ShapeDtypeStruct((rows, s_pad), jnp.float32),
            jax.ShapeDtypeStruct((batch, H), jnp.float32),
            jax.ShapeDtypeStruct((batch, H), jnp.float32),
        ),
        grid_spec=grid_spec,
        compiler_params=pltpu.CompilerParams(
            dimension_semantics=("arbitrary",),        # serial recurrence axis
            vmem_limit_bytes=vmem_limit),
        cost_estimate=cost,
    )(x_flat, prep["w_xg"], prep["bias"], prep["w_hh"],
      prep["w_out"], prep["b_out"])
    return probs_p, hn, cn


def forward_model_lstm_sd(x, prep, *, step_chunk=None, unroll=None,
                          use_bf16=False):
    """Module-faithful forward (force=True). x: (steps, inputSize), batch=1."""
    steps, _ = x.shape
    S, H = prep["state_size"], prep["hdim"]
    probs_p, hn, cn = _run_lstm_kernel(
        x, prep, steps=steps, batch=1, step_chunk=step_chunk,
        unroll=unroll, use_bf16=use_bf16)
    outputs = probs_p[:, :S].reshape(steps, 1, S)
    return outputs, (hn.reshape(1, 1, H), cn.reshape(1, 1, H))


def forward_model_lstm_sd_batched(x, prep, *, step_chunk=None, unroll=None,
                                  use_bf16=False):
    """B independent rollouts batched into sublanes. x: (steps, B, inputSize)."""
    steps, B, input_size = x.shape
    S, H = prep["state_size"], prep["hdim"]
    x_flat = x.reshape(steps * B, input_size)
    probs_p, hn, cn = _run_lstm_kernel(
        x_flat, prep, steps=steps, batch=B, step_chunk=step_chunk,
        unroll=unroll, use_bf16=use_bf16)
    outputs = probs_p[:, :S].reshape(steps, B, S)
    return outputs, (hn.reshape(1, B, H), cn.reshape(1, B, H))


# ----------------------------------------------------------------------------
# Pure-JAX reference of the original (un-fused) math, for checking.
# ----------------------------------------------------------------------------
def _jax_reference(x, params):
    """x: (steps, B, inputSize). PyTorch LSTM gate order [i, f, g, o]."""
    (w_emb_t, b_emb, w_ih_t, w_hh_t, b_ih, b_hh, w_out_t, b_out) = params
    steps, B, _ = x.shape
    H = w_emb_t.shape[1]
    h = jnp.zeros((B, H), jnp.float32)
    c = jnp.zeros((B, H), jnp.float32)
    outs = []
    for i in range(steps):
        xt = x[i]
        e = xt @ w_emb_t + b_emb
        gates = e @ w_ih_t + h @ w_hh_t + b_ih + b_hh
        i_g = jax.nn.sigmoid(gates[:, 0 * H:1 * H])
        f_g = jax.nn.sigmoid(gates[:, 1 * H:2 * H])
        g_g = jnp.tanh(gates[:, 2 * H:3 * H])
        o_g = jax.nn.sigmoid(gates[:, 3 * H:4 * H])
        c = f_g * c + i_g * g_g
        h = o_g * jnp.tanh(c)
        logits = h @ w_out_t + b_out
        outs.append(jax.nn.softmax(logits, axis=-1))
    return jnp.stack(outs, axis=0), (h[None], c[None])


def make_params(key, input_size, hdim, state_size):
    """Deterministic synthetic parameters, PyTorch layouts pre-transposed."""
    ks = jax.random.split(key, 8)
    scale = 0.1
    # nn.Linear(inputSize, hdim): W (hdim, inputSize) -> store transposed
    w_emb_t = scale * jax.random.normal(ks[0], (input_size, hdim), jnp.float32)
    b_emb = scale * jax.random.normal(ks[1], (1, hdim), jnp.float32)
    # nn.LSTM: weight_ih / weight_hh (4H, H) -> store transposed
    w_ih_t = scale * jax.random.normal(ks[2], (hdim, 4 * hdim), jnp.float32)
    w_hh_t = scale * jax.random.normal(ks[3], (hdim, 4 * hdim), jnp.float32)
    b_ih = scale * jax.random.normal(ks[4], (1, 4 * hdim), jnp.float32)
    b_hh = scale * jax.random.normal(ks[5], (1, 4 * hdim), jnp.float32)
    # nn.Linear(hdim, stateSize): W (stateSize, hdim) -> store transposed
    w_out_t = scale * jax.random.normal(ks[6], (hdim, state_size), jnp.float32)
    b_out = scale * jax.random.normal(ks[7], (1, state_size), jnp.float32)
    return (w_emb_t, b_emb, w_ih_t, w_hh_t, b_ih, b_hh, w_out_t, b_out)


if __name__ == "__main__":
    # Small, module-consistent shapes: env with 16 discrete states, 4 actions.
    STATE_SIZE = 16
    ACTION_SIZE = 4
    INPUT_SIZE = STATE_SIZE + ACTION_SIZE   # 20
    HDIM = 32
    STEPS = 8

    key = jax.random.PRNGKey(0)
    k_x, k_xb, k_p = jax.random.split(key, 3)
    params = make_params(k_p, INPUT_SIZE, HDIM, STATE_SIZE)
    prep = prepare_params(params)           # once per parameter set (rev #9)

    # --- module-faithful single-sequence forward (batch = 1) ----------------
    x = jax.random.normal(k_x, (STEPS, INPUT_SIZE), jnp.float32)
    outputs, (h_n, c_n) = forward_model_lstm_sd(x, prep)
    jax.block_until_ready((outputs, h_n, c_n))

    ref_out, (ref_h, ref_c) = _jax_reference(x[:, None, :], params)
    assert outputs.shape == (STEPS, 1, STATE_SIZE)
    assert h_n.shape == (1, 1, HDIM) and c_n.shape == (1, 1, HDIM)
    assert jnp.allclose(outputs, ref_out, atol=1e-4, rtol=1e-4)
    assert jnp.allclose(h_n, ref_h, atol=1e-4, rtol=1e-4)
    assert jnp.allclose(c_n, ref_c, atol=1e-4, rtol=1e-4)
    # Exact softmax normalization despite the 128-lane output padding.
    assert jnp.allclose(outputs.sum(-1), jnp.ones((STEPS, 1)), atol=1e-5)

    # --- batched rollouts: sublane batching + 2-chunk step grid -------------
    B = 8
    xb = jax.random.normal(k_xb, (STEPS, B, INPUT_SIZE), jnp.float32)
    outb, (hb, cb) = forward_model_lstm_sd_batched(xb, prep, step_chunk=4)
    jax.block_until_ready((outb, hb, cb))

    refb_out, (refb_h, refb_c) = _jax_reference(xb, params)
    assert outb.shape == (STEPS, B, STATE_SIZE)
    assert hb.shape == (1, B, HDIM) and cb.shape == (1, B, HDIM)
    assert jnp.allclose(outb, refb_out, atol=1e-4, rtol=1e-4)
    assert jnp.allclose(hb, refb_h, atol=1e-4, rtol=1e-4)
    assert jnp.allclose(cb, refb_c, atol=1e-4, rtol=1e-4)

    print("KERNEL_OK")
</pallas_src>

<mosaic_0001>
module attributes {stable_mosaic.version = 11 : i64} {
  func.func @_lstm_fm_kernel(%arg0: i32, %arg1: memref<8x20xf32, #tpu.memory_space<vmem>>, %arg2: memref<20x128xf32, #tpu.memory_space<vmem>>, %arg3: memref<1x128xf32, #tpu.memory_space<vmem>>, %arg4: memref<32x128xf32, #tpu.memory_space<vmem>>, %arg5: memref<32x128xf32, #tpu.memory_space<vmem>>, %arg6: memref<1x128xf32, #tpu.memory_space<vmem>>, %arg7: memref<8x128xf32, #tpu.memory_space<vmem>>, %arg8: memref<1x32xf32, #tpu.memory_space<vmem>>, %arg9: memref<1x32xf32, #tpu.memory_space<vmem>>, %arg10: memref<8x128xf32, #tpu.memory_space<vmem>>, %arg11: memref<8x32xf32, #tpu.memory_space<vmem>>, %arg12: memref<1x32xf32, #tpu.memory_space<vmem>>, %arg13: memref<1x32xf32, #tpu.memory_space<vmem>>) attributes {dimension_semantics = [#tpu.dimension_semantics<arbitrary>], iteration_bounds = array<i64: 1>, scalar_prefetch = 0 : i64, scratch_operands = 4 : i64, tpu.core_type = #tpu.core_type<tc>, window_params = [{transform_indices = @transform_0, window_bounds = array<i64: 8, 20>}, {pipeline_mode = #tpu.pipeline_mode<synchronous>, transform_indices = @transform_1, window_bounds = array<i64: 20, 128>}, {pipeline_mode = #tpu.pipeline_mode<synchronous>, transform_indices = @transform_2, window_bounds = array<i64: 1, 128>}, {pipeline_mode = #tpu.pipeline_mode<synchronous>, transform_indices = @transform_3, window_bounds = array<i64: 32, 128>}, {pipeline_mode = #tpu.pipeline_mode<synchronous>, transform_indices = @transform_4, window_bounds = array<i64: 32, 128>}, {pipeline_mode = #tpu.pipeline_mode<synchronous>, transform_indices = @transform_5, window_bounds = array<i64: 1, 128>}, {transform_indices = @transform_6, window_bounds = array<i64: 8, 128>}, {pipeline_mode = #tpu.pipeline_mode<synchronous>, transform_indices = @transform_7, window_bounds = array<i64: 1, 32>}, {pipeline_mode = #tpu.pipeline_mode<synchronous>, transform_indices = @transform_8, window_bounds = array<i64: 1, 32>}]} {
    %c0_i32 = arith.constant 0 : i32
    %0 = arith.cmpi eq, %arg0, %c0_i32 : i32
    %1 = arith.extui %0 : i1 to i32
    %c0_i32_0 = arith.constant 0 : i32
    %2 = arith.cmpi ne, %1, %c0_i32_0 : i32
    scf.if %2 {
      %cst_74 = arith.constant 0.000000e+00 : f32
      %218 = vector.broadcast %cst_74 : f32 to vector<1x32xf32>
      %c0_75 = arith.constant 0 : index
      %c0_76 = arith.constant 0 : index
      %219 = vector.load %arg12[%c0_75, %c0_76] : memref<1x32xf32, #tpu.memory_space<vmem>>, vector<1x32xf32>
      tpu.vector_store %arg12[%c0_75, %c0_76], %218 {strides = array<i32>} : memref<1x32xf32, #tpu.memory_space<vmem>>, vector<1x32xf32>,
      %cst_77 = arith.constant 0.000000e+00 : f32
      %220 = vector.broadcast %cst_77 : f32 to vector<1x32xf32>
      %c0_78 = arith.constant 0 : index
      %c0_79 = arith.constant 0 : index
      %221 = vector.load %arg13[%c0_78, %c0_79] : memref<1x32xf32, #tpu.memory_space<vmem>>, vector<1x32xf32>
      tpu.vector_store %arg13[%c0_78, %c0_79], %220 {strides = array<i32>} : memref<1x32xf32, #tpu.memory_space<vmem>>, vector<1x32xf32>,
    } else {
    }
    %c0 = arith.constant 0 : index
    %c0_1 = arith.constant 0 : index
    %3 = vector.load %arg1[%c0, %c0_1] : memref<8x20xf32, #tpu.memory_space<vmem>>, vector<8x20xf32>
    %c0_2 = arith.constant 0 : index
    %c0_3 = arith.constant 0 : index
    %4 = vector.load %arg2[%c0_2, %c0_3] : memref<20x128xf32, #tpu.memory_space<vmem>>, vector<20x128xf32>
    %cst = arith.constant dense<0.000000e+00> : vector<8x128xf32>
    %5 = tpu.matmul %3, %4, %cst {dimension_numbers = #tpu.dot_dimension_numbers<[1], [0], [0], [1], [0, 0, 1, 1], [], []>} : vector<8x20xf32>, vector<20x128xf32>, vector<8x128xf32> -> vector<8x128xf32>
    %c0_4 = arith.constant 0 : index
    %c0_5 = arith.constant 0 : index
    %6 = vector.load %arg3[%c0_4, %c0_5] : memref<1x128xf32, #tpu.memory_space<vmem>>, vector<1x128xf32>
    %7 = vector.broadcast %6 : vector<1x128xf32> to vector<8x128xf32>
    %8 = arith.addf %5, %7 : vector<8x128xf32>
    %c0_6 = arith.constant 0 : index
    %c0_7 = arith.constant 0 : index
    %9 = vector.load %arg10[%c0_6, %c0_7] : memref<8x128xf32, #tpu.memory_space<vmem>>, vector<8x128xf32>
    tpu.vector_store %arg10[%c0_6, %c0_7], %8 {strides = array<i32>} : memref<8x128xf32, #tpu.memory_space<vmem>>, vector<8x128xf32>,
    %c0_8 = arith.constant 0 : index
    %c0_9 = arith.constant 0 : index
    %10 = vector.load %arg4[%c0_8, %c0_9] : memref<32x128xf32, #tpu.memory_space<vmem>>, vector<32x128xf32>
    %c0_10 = arith.constant 0 : index
    %c0_11 = arith.constant 0 : index
    %11 = vector.load %arg12[%c0_10, %c0_11] : memref<1x32xf32, #tpu.memory_space<vmem>>, vector<1x32xf32>
    %c0_12 = arith.constant 0 : index
    %c0_13 = arith.constant 0 : index
    %12 = vector.load %arg13[%c0_12, %c0_13] : memref<1x32xf32, #tpu.memory_space<vmem>>, vector<1x32xf32>
    %c0_i32_14 = arith.constant 0 : i32
    %c1_i32 = arith.constant 1 : i32
    %13 = arith.muli %c0_i32_14, %c1_i32 : i32
    %14 = tpu.assume_multiple %13, 1 : i32
    %15 = arith.index_cast %14 : i32 to index
    %c0_15 = arith.constant 0 : index
    %16 = vector.load %arg10[%15, %c0_15] : memref<8x128xf32, #tpu.memory_space<vmem>>, vector<1x128xf32>
    %cst_16 = arith.constant dense<0.000000e+00> : vector<1x128xf32>
    %17 = tpu.matmul %11, %10, %cst_16 {dimension_numbers = #tpu.dot_dimension_numbers<[1], [0], [0], [1], [0, 0, 1, 1], [], []>} : vector<1x32xf32>, vector<32x128xf32>, vector<1x128xf32> -> vector<1x128xf32>
    %18 = arith.addf %16, %17 : vector<1x128xf32>
    %19 = arith.negf %18 : vector<1x128xf32>
    %20 = math.exp %19 : vector<1x128xf32>
    %cst_17 = arith.constant 1.000000e+00 : f32
    %21 = vector.broadcast %cst_17 : f32 to vector<1x128xf32>
    %22 = arith.addf %21, %20 : vector<1x128xf32>
    %23 = arith.divf %21, %22 : vector<1x128xf32>
    %24 = math.tanh %18 : vector<1x128xf32>
    %25 = vector.extract_strided_slice %23 {offsets = [0, 0], sizes = [1, 32], strides = [1, 1]} : vector<1x128xf32> to vector<1x32xf32>
    %26 = vector.extract_strided_slice %23 {offsets = [0, 32], sizes = [1, 32], strides = [1, 1]} : vector<1x128xf32> to vector<1x32xf32>
    %27 = vector.extract_strided_slice %24 {offsets = [0, 64], sizes = [1, 32], strides = [1, 1]} : vector<1x128xf32> to vector<1x32xf32>
    %28 = vector.extract_strided_slice %23 {offsets = [0, 96], sizes = [1, 32], strides = [1, 1]} : vector<1x128xf32> to vector<1x32xf32>
    %29 = arith.mulf %26, %12 : vector<1x32xf32>
    %30 = arith.mulf %25, %27 : vector<1x32xf32>
    %31 = arith.addf %29, %30 : vector<1x32xf32>
    %32 = math.tanh %31 : vector<1x32xf32>
    %33 = arith.mulf %28, %32 : vector<1x32xf32>
    %34 = arith.index_cast %14 : i32 to index
    %c0_18 = arith.constant 0 : index
    %35 = vector.load %arg11[%34, %c0_18] : memref<8x32xf32, #tpu.memory_space<vmem>>, vector<1x32xf32>
    tpu.vector_store %arg11[%34, %c0_18], %33 {strides = array<i32>} : memref<8x32xf32, #tpu.memory_space<vmem>>, vector<1x32xf32>,
    %c1_i32_19 = arith.constant 1 : i32
    %c1_i32_20 = arith.constant 1 : i32
    %36 = arith.muli %c1_i32_19, %c1_i32_20 : i32
    %37 = tpu.assume_multiple %36, 1 : i32
    %38 = arith.index_cast %37 : i32 to index
    %c0_21 = arith.constant 0 : index
    %39 = vector.load %arg10[%38, %c0_21] : memref<8x128xf32, #tpu.memory_space<vmem>>, vector<1x128xf32>
    %cst_22 = arith.constant dense<0.000000e+00> : vector<1x128xf32>
    %40 = tpu.matmul %33, %10, %cst_22 {dimension_numbers = #tpu.dot_dimension_numbers<[1], [0], [0], [1], [0, 0, 1, 1], [], []>} : vector<1x32xf32>, vector<32x128xf32>, vector<1x128xf32> -> vector<1x128xf32>
    %41 = arith.addf %39, %40 : vector<1x128xf32>
    %42 = arith.negf %41 : vector<1x128xf32>
    %43 = math.exp %42 : vector<1x128xf32>
    %cst_23 = arith.constant 1.000000e+00 : f32
    %44 = vector.broadcast %cst_23 : f32 to vector<1x128xf32>
    %45 = arith.addf %44, %43 : vector<1x128xf32>
    %46 = arith.divf %44, %45 : vector<1x128xf32>
    %47 = math.tanh %41 : vector<1x128xf32>
    %48 = vector.extract_strided_slice %46 {offsets = [0, 0], sizes = [1, 32], strides = [1, 1]} : vector<1x128xf32> to vector<1x32xf32>
    %49 = vector.extract_strided_slice %46 {offsets = [0, 32], sizes = [1, 32], strides = [1, 1]} : vector<1x128xf32> to vector<1x32xf32>
    %50 = vector.extract_strided_slice %47 {offsets = [0, 64], sizes = [1, 32], strides = [1, 1]} : vector<1x128xf32> to vector<1x32xf32>
    %51 = vector.extract_strided_slice %46 {offsets = [0, 96], sizes = [1, 32], strides = [1, 1]} : vector<1x128xf32> to vector<1x32xf32>
    %52 = arith.mulf %49, %31 : vector<1x32xf32>
    %53 = arith.mulf %48, %50 : vector<1x32xf32>
    %54 = arith.addf %52, %53 : vector<1x32xf32>
    %55 = math.tanh %54 : vector<1x32xf32>
    %56 = arith.mulf %51, %55 : vector<1x32xf32>
    %57 = arith.index_cast %37 : i32 to index
    %c0_24 = arith.constant 0 : index
    %58 = vector.load %arg11[%57, %c0_24] : memref<8x32xf32, #tpu.memory_space<vmem>>, vector<1x32xf32>
    tpu.vector_store %arg11[%57, %c0_24], %56 {strides = array<i32>} : memref<8x32xf32, #tpu.memory_space<vmem>>, vector<1x32xf32>,
    %c2_i32 = arith.constant 2 : i32
    %c1_i32_25 = arith.constant 1 : i32
    %59 = arith.muli %c2_i32, %c1_i32_25 : i32
    %60 = tpu.assume_multiple %59, 1 : i32
    %61 = arith.index_cast %60 : i32 to index
    %c0_26 = arith.constant 0 : index
    %62 = vector.load %arg10[%61, %c0_26] : memref<8x128xf32, #tpu.memory_space<vmem>>, vector<1x128xf32>
    %cst_27 = arith.constant dense<0.000000e+00> : vector<1x128xf32>
    %63 = tpu.matmul %56, %10, %cst_27 {dimension_numbers = #tpu.dot_dimension_numbers<[1], [0], [0], [1], [0, 0, 1, 1], [], []>} : vector<1x32xf32>, vector<32x128xf32>, vector<1x128xf32> -> vector<1x128xf32>
    %64 = arith.addf %62, %63 : vector<1x128xf32>
    %65 = arith.negf %64 : vector<1x128xf32>
    %66 = math.exp %65 : vector<1x128xf32>
    %cst_28 = arith.constant 1.000000e+00 : f32
    %67 = vector.broadcast %cst_28 : f32 to vector<1x128xf32>
    %68 = arith.addf %67, %66 : vector<1x128xf32>
    %69 = arith.divf %67, %68 : vector<1x128xf32>
    %70 = math.tanh %64 : vector<1x128xf32>
    %71 = vector.extract_strided_slice %69 {offsets = [0, 0], sizes = [1, 32], strides = [1, 1]} : vector<1x128xf32> to vector<1x32xf32>
    %72 = vector.extract_strided_slice %69 {offsets = [0, 32], sizes = [1, 32], strides = [1, 1]} : vector<1x128xf32> to vector<1x32xf32>
    %73 = vector.extract_strided_slice %70 {offsets = [0, 64], sizes = [1, 32], strides = [1, 1]} : vector<1x128xf32> to vector<1x32xf32>
    %74 = vector.extract_strided_slice %69 {offsets = [0, 96], sizes = [1, 32], strides = [1, 1]} : vector<1x128xf32> to vector<1x32xf32>
    %75 = arith.mulf %72, %54 : vector<1x32xf32>
    %76 = arith.mulf %71, %73 : vector<1x32xf32>
    %77 = arith.addf %75, %76 : vector<1x32xf32>
    %78 = math.tanh %77 : vector<1x32xf32>
    %79 = arith.mulf %74, %78 : vector<1x32xf32>
    %80 = arith.index_cast %60 : i32 to index
    %c0_29 = arith.constant 0 : index
    %81 = vector.load %arg11[%80, %c0_29] : memref<8x32xf32, #tpu.memory_space<vmem>>, vector<1x32xf32>
    tpu.vector_store %arg11[%80, %c0_29], %79 {strides = array<i32>} : memref<8x32xf32, #tpu.memory_space<vmem>>, vector<1x32xf32>,
    %c3_i32 = arith.constant 3 : i32
    %c1_i32_30 = arith.constant 1 : i32
    %82 = arith.muli %c3_i32, %c1_i32_30 : i32
    %83 = tpu.assume_multiple %82, 1 : i32
    %84 = arith.index_cast %83 : i32 to index
    %c0_31 = arith.constant 0 : index
    %85 = vector.load %arg10[%84, %c0_31] : memref<8x128xf32, #tpu.memory_space<vmem>>, vector<1x128xf32>
    %cst_32 = arith.constant dense<0.000000e+00> : vector<1x128xf32>
    %86 = tpu.matmul %79, %10, %cst_32 {dimension_numbers = #tpu.dot_dimension_numbers<[1], [0], [0], [1], [0, 0, 1, 1], [], []>} : vector<1x32xf32>, vector<32x128xf32>, vector<1x128xf32> -> vector<1x128xf32>
    %87 = arith.addf %85, %86 : vector<1x128xf32>
    %88 = arith.negf %87 : vector<1x128xf32>
    %89 = math.exp %88 : vector<1x128xf32>
    %cst_33 = arith.constant 1.000000e+00 : f32
    %90 = vector.broadcast %cst_33 : f32 to vector<1x128xf32>
    %91 = arith.addf %90, %89 : vector<1x128xf32>
    %92 = arith.divf %90, %91 : vector<1x128xf32>
    %93 = math.tanh %87 : vector<1x128xf32>
    %94 = vector.extract_strided_slice %92 {offsets = [0, 0], sizes = [1, 32], strides = [1, 1]} : vector<1x128xf32> to vector<1x32xf32>
    %95 = vector.extract_strided_slice %92 {offsets = [0, 32], sizes = [1, 32], strides = [1, 1]} : vector<1x128xf32> to vector<1x32xf32>
    %96 = vector.extract_strided_slice %93 {offsets = [0, 64], sizes = [1, 32], strides = [1, 1]} : vector<1x128xf32> to vector<1x32xf32>
    %97 = vector.extract_strided_slice %92 {offsets = [0, 96], sizes = [1, 32], strides = [1, 1]} : vector<1x128xf32> to vector<1x32xf32>
    %98 = arith.mulf %95, %77 : vector<1x32xf32>
    %99 = arith.mulf %94, %96 : vector<1x32xf32>
    %100 = arith.addf %98, %99 : vector<1x32xf32>
    %101 = math.tanh %100 : vector<1x32xf32>
    %102 = arith.mulf %97, %101 : vector<1x32xf32>
    %103 = arith.index_cast %83 : i32 to index
    %c0_34 = arith.constant 0 : index
    %104 = vector.load %arg11[%103, %c0_34] : memref<8x32xf32, #tpu.memory_space<vmem>>, vector<1x32xf32>
    tpu.vector_store %arg11[%103, %c0_34], %102 {strides = array<i32>} : memref<8x32xf32, #tpu.memory_space<vmem>>, vector<1x32xf32>,
    %c4_i32 = arith.constant 4 : i32
    %c1_i32_35 = arith.constant 1 : i32
    %105 = arith.muli %c4_i32, %c1_i32_35 : i32
    %106 = tpu.assume_multiple %105, 1 : i32
    %107 = arith.index_cast %106 : i32 to index
    %c0_36 = arith.constant 0 : index
    %108 = vector.load %arg10[%107, %c0_36] : memref<8x128xf32, #tpu.memory_space<vmem>>, vector<1x128xf32>
    %cst_37 = arith.constant dense<0.000000e+00> : vector<1x128xf32>
    %109 = tpu.matmul %102, %10, %cst_37 {dimension_numbers = #tpu.dot_dimension_numbers<[1], [0], [0], [1], [0, 0, 1, 1], [], []>} : vector<1x32xf32>, vector<32x128xf32>, vector<1x128xf32> -> vector<1x128xf32>
    %110 = arith.addf %108, %109 : vector<1x128xf32>
    %111 = arith.negf %110 : vector<1x128xf32>
    %112 = math.exp %111 : vector<1x128xf32>
    %cst_38 = arith.constant 1.000000e+00 : f32
    %113 = vector.broadcast %cst_38 : f32 to vector<1x128xf32>
    %114 = arith.addf %113, %112 : vector<1x128xf32>
    %115 = arith.divf %113, %114 : vector<1x128xf32>
    %116 = math.tanh %110 : vector<1x128xf32>
    %117 = vector.extract_strided_slice %115 {offsets = [0, 0], sizes = [1, 32], strides = [1, 1]} : vector<1x128xf32> to vector<1x32xf32>
    %118 = vector.extract_strided_slice %115 {offsets = [0, 32], sizes = [1, 32], strides = [1, 1]} : vector<1x128xf32> to vector<1x32xf32>
    %119 = vector.extract_strided_slice %116 {offsets = [0, 64], sizes = [1, 32], strides = [1, 1]} : vector<1x128xf32> to vector<1x32xf32>
    %120 = vector.extract_strided_slice %115 {offsets = [0, 96], sizes = [1, 32], strides = [1, 1]} : vector<1x128xf32> to vector<1x32xf32>
    %121 = arith.mulf %118, %100 : vector<1x32xf32>
    %122 = arith.mulf %117, %119 : vector<1x32xf32>
    %123 = arith.addf %121, %122 : vector<1x32xf32>
    %124 = math.tanh %123 : vector<1x32xf32>
    %125 = arith.mulf %120, %124 : vector<1x32xf32>
    %126 = arith.index_cast %106 : i32 to index
    %c0_39 = arith.constant 0 : index
    %127 = vector.load %arg11[%126, %c0_39] : memref<8x32xf32, #tpu.memory_space<vmem>>, vector<1x32xf32>
    tpu.vector_store %arg11[%126, %c0_39], %125 {strides = array<i32>} : memref<8x32xf32, #tpu.memory_space<vmem>>, vector<1x32xf32>,
    %c5_i32 = arith.constant 5 : i32
    %c1_i32_40 = arith.constant 1 : i32
    %128 = arith.muli %c5_i32, %c1_i32_40 : i32
    %129 = tpu.assume_multiple %128, 1 : i32
    %130 = arith.index_cast %129 : i32 to index
    %c0_41 = arith.constant 0 : index
    %131 = vector.load %arg10[%130, %c0_41] : memref<8x128xf32, #tpu.memory_space<vmem>>, vector<1x128xf32>
    %cst_42 = arith.constant dense<0.000000e+00> : vector<1x128xf32>
    %132 = tpu.matmul %125, %10, %cst_42 {dimension_numbers = #tpu.dot_dimension_numbers<[1], [0], [0], [1], [0, 0, 1, 1], [], []>} : vector<1x32xf32>, vector<32x128xf32>, vector<1x128xf32> -> vector<1x128xf32>
    %133 = arith.addf %131, %132 : vector<1x128xf32>
    %134 = arith.negf %133 : vector<1x128xf32>
    %135 = math.exp %134 : vector<1x128xf32>
    %cst_43 = arith.constant 1.000000e+00 : f32
    %136 = vector.broadcast %cst_43 : f32 to vector<1x128xf32>
    %137 = arith.addf %136, %135 : vector<1x128xf32>
    %138 = arith.divf %136, %137 : vector<1x128xf32>
    %139 = math.tanh %133 : vector<1x128xf32>
    %140 = vector.extract_strided_slice %138 {offsets = [0, 0], sizes = [1, 32], strides = [1, 1]} : vector<1x128xf32> to vector<1x32xf32>
    %141 = vector.extract_strided_slice %138 {offsets = [0, 32], sizes = [1, 32], strides = [1, 1]} : vector<1x128xf32> to vector<1x32xf32>
    %142 = vector.extract_strided_slice %139 {offsets = [0, 64], sizes = [1, 32], strides = [1, 1]} : vector<1x128xf32> to vector<1x32xf32>
    %143 = vector.extract_strided_slice %138 {offsets = [0, 96], sizes = [1, 32], strides = [1, 1]} : vector<1x128xf32> to vector<1x32xf32>
    %144 = arith.mulf %141, %123 : vector<1x32xf32>
    %145 = arith.mulf %140, %142 : vector<1x32xf32>
    %146 = arith.addf %144, %145 : vector<1x32xf32>
    %147 = math.tanh %146 : vector<1x32xf32>
    %148 = arith.mulf %143, %147 : vector<1x32xf32>
    %149 = arith.index_cast %129 : i32 to index
    %c0_44 = arith.constant 0 : index
    %150 = vector.load %arg11[%149, %c0_44] : memref<8x32xf32, #tpu.memory_space<vmem>>, vector<1x32xf32>
    tpu.vector_store %arg11[%149, %c0_44], %148 {strides = array<i32>} : memref<8x32xf32, #tpu.memory_space<vmem>>, vector<1x32xf32>,
    %c6_i32 = arith.constant 6 : i32
    %c1_i32_45 = arith.constant 1 : i32
    %151 = arith.muli %c6_i32, %c1_i32_45 : i32
    %152 = tpu.assume_multiple %151, 1 : i32
    %153 = arith.index_cast %152 : i32 to index
    %c0_46 = arith.constant 0 : index
    %154 = vector.load %arg10[%153, %c0_46] : memref<8x128xf32, #tpu.memory_space<vmem>>, vector<1x128xf32>
    %cst_47 = arith.constant dense<0.000000e+00> : vector<1x128xf32>
    %155 = tpu.matmul %148, %10, %cst_47 {dimension_numbers = #tpu.dot_dimension_numbers<[1], [0], [0], [1], [0, 0, 1, 1], [], []>} : vector<1x32xf32>, vector<32x128xf32>, vector<1x128xf32> -> vector<1x128xf32>
    %156 = arith.addf %154, %155 : vector<1x128xf32>
    %157 = arith.negf %156 : vector<1x128xf32>
    %158 = math.exp %157 : vector<1x128xf32>
    %cst_48 = arith.constant 1.000000e+00 : f32
    %159 = vector.broadcast %cst_48 : f32 to vector<1x128xf32>
    %160 = arith.addf %159, %158 : vector<1x128xf32>
    %161 = arith.divf %159, %160 : vector<1x128xf32>
    %162 = math.tanh %156 : vector<1x128xf32>
    %163 = vector.extract_strided_slice %161 {offsets = [0, 0], sizes = [1, 32], strides = [1, 1]} : vector<1x128xf32> to vector<1x32xf32>
    %164 = vector.extract_strided_slice %161 {offsets = [0, 32], sizes = [1, 32], strides = [1, 1]} : vector<1x128xf32> to vector<1x32xf32>
    %165 = vector.extract_strided_slice %162 {offsets = [0, 64], sizes = [1, 32], strides = [1, 1]} : vector<1x128xf32> to vector<1x32xf32>
    %166 = vector.extract_strided_slice %161 {offsets = [0, 96], sizes = [1, 32], strides = [1, 1]} : vector<1x128xf32> to vector<1x32xf32>
    %167 = arith.mulf %164, %146 : vector<1x32xf32>
    %168 = arith.mulf %163, %165 : vector<1x32xf32>
    %169 = arith.addf %167, %168 : vector<1x32xf32>
    %170 = math.tanh %169 : vector<1x32xf32>
    %171 = arith.mulf %166, %170 : vector<1x32xf32>
    %172 = arith.index_cast %152 : i32 to index
    %c0_49 = arith.constant 0 : index
    %173 = vector.load %arg11[%172, %c0_49] : memref<8x32xf32, #tpu.memory_space<vmem>>, vector<1x32xf32>
    tpu.vector_store %arg11[%172, %c0_49], %171 {strides = array<i32>} : memref<8x32xf32, #tpu.memory_space<vmem>>, vector<1x32xf32>,
    %c7_i32 = arith.constant 7 : i32
    %c1_i32_50 = arith.constant 1 : i32
    %174 = arith.muli %c7_i32, %c1_i32_50 : i32
    %175 = tpu.assume_multiple %174, 1 : i32
    %176 = arith.index_cast %175 : i32 to index
    %c0_51 = arith.constant 0 : index
    %177 = vector.load %arg10[%176, %c0_51] : memref<8x128xf32, #tpu.memory_space<vmem>>, vector<1x128xf32>
    %cst_52 = arith.constant dense<0.000000e+00> : vector<1x128xf32>
    %178 = tpu.matmul %171, %10, %cst_52 {dimension_numbers = #tpu.dot_dimension_numbers<[1], [0], [0], [1], [0, 0, 1, 1], [], []>} : vector<1x32xf32>, vector<32x128xf32>, vector<1x128xf32> -> vector<1x128xf32>
    %179 = arith.addf %177, %178 : vector<1x128xf32>
    %180 = arith.negf %179 : vector<1x128xf32>
    %181 = math.exp %180 : vector<1x128xf32>
    %cst_53 = arith.constant 1.000000e+00 : f32
    %182 = vector.broadcast %cst_53 : f32 to vector<1x128xf32>
    %183 = arith.addf %182, %181 : vector<1x128xf32>
    %184 = arith.divf %182, %183 : vector<1x128xf32>
    %185 = math.tanh %179 : vector<1x128xf32>
    %186 = vector.extract_strided_slice %184 {offsets = [0, 0], sizes = [1, 32], strides = [1, 1]} : vector<1x128xf32> to vector<1x32xf32>
    %187 = vector.extract_strided_slice %184 {offsets = [0, 32], sizes = [1, 32], strides = [1, 1]} : vector<1x128xf32> to vector<1x32xf32>
    %188 = vector.extract_strided_slice %185 {offsets = [0, 64], sizes = [1, 32], strides = [1, 1]} : vector<1x128xf32> to vector<1x32xf32>
    %189 = vector.extract_strided_slice %184 {offsets = [0, 96], sizes = [1, 32], strides = [1, 1]} : vector<1x128xf32> to vector<1x32xf32>
    %190 = arith.mulf %187, %169 : vector<1x32xf32>
    %191 = arith.mulf %186, %188 : vector<1x32xf32>
    %192 = arith.addf %190, %191 : vector<1x32xf32>
    %193 = math.tanh %192 : vector<1x32xf32>
    %194 = arith.mulf %189, %193 : vector<1x32xf32>
    %195 = arith.index_cast %175 : i32 to index
    %c0_54 = arith.constant 0 : index
    %196 = vector.load %arg11[%195, %c0_54] : memref<8x32xf32, #tpu.memory_space<vmem>>, vector<1x32xf32>
    tpu.vector_store %arg11[%195, %c0_54], %194 {strides = array<i32>} : memref<8x32xf32, #tpu.memory_space<vmem>>, vector<1x32xf32>,
    %c8_i32 = arith.constant 8 : i32
    %c0_55 = arith.constant 0 : index
    %c0_56 = arith.constant 0 : index
    %197 = vector.load %arg12[%c0_55, %c0_56] : memref<1x32xf32, #tpu.memory_space<vmem>>, vector<1x32xf32>
    tpu.vector_store %arg12[%c0_55, %c0_56], %194 {strides = array<i32>} : memref<1x32xf32, #tpu.memory_space<vmem>>, vector<1x32xf32>,
    %c0_57 = arith.constant 0 : index
    %c0_58 = arith.constant 0 : index
    %198 = vector.load %arg13[%c0_57, %c0_58] : memref<1x32xf32, #tpu.memory_space<vmem>>, vector<1x32xf32>
    tpu.vector_store %arg13[%c0_57, %c0_58], %192 {strides = array<i32>} : memref<1x32xf32, #tpu.memory_space<vmem>>, vector<1x32xf32>,
    %c0_59 = arith.constant 0 : index
    %c0_60 = arith.constant 0 : index
    %199 = vector.load %arg8[%c0_59, %c0_60] : memref<1x32xf32, #tpu.memory_space<vmem>>, vector<1x32xf32>
    tpu.vector_store %arg8[%c0_59, %c0_60], %194 {strides = array<i32>} : memref<1x32xf32, #tpu.memory_space<vmem>>, vector<1x32xf32>,
    %c0_61 = arith.constant 0 : index
    %c0_62 = arith.constant 0 : index
    %200 = vector.load %arg9[%c0_61, %c0_62] : memref<1x32xf32, #tpu.memory_space<vmem>>, vector<1x32xf32>
    tpu.vector_store %arg9[%c0_61, %c0_62], %192 {strides = array<i32>} : memref<1x32xf32, #tpu.memory_space<vmem>>, vector<1x32xf32>,
    %c0_63 = arith.constant 0 : index
    %c0_64 = arith.constant 0 : index
    %201 = vector.load %arg11[%c0_63, %c0_64] : memref<8x32xf32, #tpu.memory_space<vmem>>, vector<8x32xf32>
    %c0_65 = arith.constant 0 : index
    %c0_66 = arith.constant 0 : index
    %202 = vector.load %arg5[%c0_65, %c0_66] : memref<32x128xf32, #tpu.memory_space<vmem>>, vector<32x128xf32>
    %cst_67 = arith.constant dense<0.000000e+00> : vector<8x128xf32>
    %203 = tpu.matmul %201, %202, %cst_67 {dimension_numbers = #tpu.dot_dimension_numbers<[1], [0], [0], [1], [0, 0, 1, 1], [], []>} : vector<8x32xf32>, vector<32x128xf32>, vector<8x128xf32> -> vector<8x128xf32>
    %c0_68 = arith.constant 0 : index
    %c0_69 = arith.constant 0 : index
    %204 = vector.load %arg6[%c0_68, %c0_69] : memref<1x128xf32, #tpu.memory_space<vmem>>, vector<1x128xf32>
    %205 = vector.broadcast %204 : vector<1x128xf32> to vector<8x128xf32>
    %206 = arith.addf %203, %205 : vector<8x128xf32>
    %cst_70 = arith.constant dense<0xFF800000> : vector<8xf32>
    %207 = vector.multi_reduction <maximumf>, %206, %cst_70 [1] : vector<8x128xf32> to vector<8xf32>
    %208 = vector.shape_cast %207 : vector<8xf32> to vector<8x1xf32>
    %209 = vector.broadcast %208 : vector<8x1xf32> to vector<8x128xf32>
    %210 = arith.subf %206, %209 : vector<8x128xf32>
    %211 = math.exp %210 : vector<8x128xf32>
    %cst_71 = arith.constant dense<0.000000e+00> : vector<8xf32>
    %212 = vector.multi_reduction <add>, %211, %cst_71 [1] : vector<8x128xf32> to vector<8xf32>
    %213 = vector.shape_cast %212 : vector<8xf32> to vector<8x1xf32>
    %214 = tpu.reciprocal %213 : vector<8x1xf32> -> vector<8x1xf32>
    %215 = vector.broadcast %214 : vector<8x1xf32> to vector<8x128xf32>
    %216 = arith.mulf %211, %215 : vector<8x128xf32>
    %c0_72 = arith.constant 0 : index
    %c0_73 = arith.constant 0 : index
    %217 = vector.load %arg7[%c0_72, %c0_73] : memref<8x128xf32, #tpu.memory_space<vmem>>, vector<8x128xf32>
    tpu.vector_store %arg7[%c0_72, %c0_73], %216 {strides = array<i32>} : memref<8x128xf32, #tpu.memory_space<vmem>>, vector<8x128xf32>,
    return
  }
  func.func @transform_0(%arg0: i32) -> (i32, i32) {
    %c0_i32 = arith.constant 0 : i32
    %c0_i32_0 = arith.constant 0 : i32
    return %arg0, %c0_i32 : i32, i32
  }
  func.func @transform_1(%arg0: i32) -> (i32, i32) {
    %c0_i32 = arith.constant 0 : i32
    %c0_i32_0 = arith.constant 0 : i32
    %c0_i32_1 = arith.constant 0 : i32
    return %c0_i32, %c0_i32_0 : i32, i32
  }
  func.func @transform_2(%arg0: i32) -> (i32, i32) {
    %c0_i32 = arith.constant 0 : i32
    %c0_i32_0 = arith.constant 0 : i32
    %c0_i32_1 = arith.constant 0 : i32
    return %c0_i32, %c0_i32_0 : i32, i32
  }
  func.func @transform_3(%arg0: i32) -> (i32, i32) {
    %c0_i32 = arith.constant 0 : i32
    %c0_i32_0 = arith.constant 0 : i32
    %c0_i32_1 = arith.constant 0 : i32
    return %c0_i32, %c0_i32_0 : i32, i32
  }
  func.func @transform_4(%arg0: i32) -> (i32, i32) {
    %c0_i32 = arith.constant 0 : i32
    %c0_i32_0 = arith.constant 0 : i32
    %c0_i32_1 = arith.constant 0 : i32
    return %c0_i32, %c0_i32_0 : i32, i32
  }
  func.func @transform_5(%arg0: i32) -> (i32, i32) {
    %c0_i32 = arith.constant 0 : i32
    %c0_i32_0 = arith.constant 0 : i32
    %c0_i32_1 = arith.constant 0 : i32
    return %c0_i32, %c0_i32_0 : i32, i32
  }
  func.func @transform_6(%arg0: i32) -> (i32, i32) {
    %c0_i32 = arith.constant 0 : i32
    %c0_i32_0 = arith.constant 0 : i32
    return %arg0, %c0_i32 : i32, i32
  }
  func.func @transform_7(%arg0: i32) -> (i32, i32) {
    %c0_i32 = arith.constant 0 : i32
    %c0_i32_0 = arith.constant 0 : i32
    %c0_i32_1 = arith.constant 0 : i32
    return %c0_i32, %c0_i32_0 : i32, i32
  }
  func.func @transform_8(%arg0: i32) -> (i32, i32) {
    %c0_i32 = arith.constant 0 : i32
    %c0_i32_0 = arith.constant 0 : i32
    %c0_i32_1 = arith.constant 0 : i32
    return %c0_i32, %c0_i32_0 : i32, i32
  }
}

</mosaic_0001>

<llo_original>
// kernel: tpu_custom_call.1
$region0: #{tpu_custom_call.1}
  #allocation0 [shape = 'u32[]', space=smem, size = 0x4, offset = 0x4, fixed_abs, tag = 'smem constant byte address 0x4 - core index']
  #allocation1 [shape = 'u32[144,128]{1,0:T(1,128)}', space=vmem, size = 0x12000, scoped, tag = 'internal scratch']
  #allocation2 [shape = 'f32[8,128]{1,0:T(8,128)}', space=vmem, size = 0x1000, scoped, tag = 'scratch operand']
  #allocation3 [shape = 'f32[8,32]{1,0:T(8,128)}', space=vmem, size = 0x1000, scoped, tag = 'scratch operand']
  #allocation4 [shape = 'f32[1,32]{1,0:T(1,128)}', space=vmem, size = 0x200, scoped, tag = 'scratch operand']
  #allocation5 [shape = 'f32[1,32]{1,0:T(1,128)}', space=vmem, size = 0x200, scoped, tag = 'scratch operand']
  %s0 = inlined_call_operand.hbm [shape: f32[8,20], index: 0, kind: input, shape index: {}]
  %s1 = inlined_call_operand.hbm [shape: f32[20,128], index: 1, kind: input, shape index: {}]
  %s2 = inlined_call_operand.vmem [shape: f32[1,128], index: 2, kind: input, shape index: {}]
  %s3 = inlined_call_operand.hbm [shape: f32[32,128], index: 3, kind: input, shape index: {}]
  %s4 = inlined_call_operand.hbm [shape: f32[32,128], index: 4, kind: input, shape index: {}]
  %s5 = inlined_call_operand.vmem [shape: f32[1,128], index: 5, kind: input, shape index: {}]
  %s6 = inlined_call_operand.hbm [shape: f32[8,128], index: 6, kind: output, shape index: {0}]
  %s7 = inlined_call_operand.hbm [shape: f32[1,32], index: 7, kind: output, shape index: {1}]
  %s8 = inlined_call_operand.hbm [shape: f32[1,32], index: 8, kind: output, shape index: {2}]
  %9 = xla_tuple %s6, %s7, %s8
  %s10 = sld [smem:[#allocation0]]
  $region70: #{tpu_custom_call.1} parent=0
    _
  %s12 = ssub.s32 1, %s10
  %s13 = scalar_select 0, %s12, %s10
  $region1: #{tpu_custom_call.1} parent=0
    #allocation6 [shape = 'u8[4096]{0}', space=vmem, size = 0x1000, scoped, tag = 'input window, operand 0, single buffered']
    #allocation7 [shape = 's32[1]{0}', space=sflag, size = 0x4, scoped, tag = 'scoped memory for tpu_custom_call.1']
    #allocation8 [shape = 's32[1]{0}', space=sflag, size = 0x4, scoped, tag = 'scoped memory for tpu_custom_call.1']
    #allocation9 [shape = 'u8[12288]{0}', space=vmem, size = 0x3000, scoped, tag = 'input window, operand 1, single buffered']
    #allocation10 [shape = 's32[1]{0}', space=sflag, size = 0x4, scoped, tag = 'scoped memory for tpu_custom_call.1']
    #allocation11 [shape = 'u8[16384]{0}', space=vmem, size = 0x4000, scoped, tag = 'input window, operand 3, single buffered']
    #allocation12 [shape = 'u8[16384]{0}', space=vmem, size = 0x4000, scoped, tag = 'input window, operand 4, single buffered']
    #allocation13 [shape = 's32[1]{0}', space=sflag, size = 0x4, scoped, tag = 'scoped memory for tpu_custom_call.1']
    #allocation14 [shape = 'u8[4096]{0}', space=vmem, size = 0x1000, scoped, tag = 'output window, operand 0, single buffered']
    #allocation15 [shape = 'u8[512]{0}', space=vmem, size = 0x400, scoped, tag = 'output window, operand 1, single buffered']
    #allocation16 [shape = 's32[1]{0}', space=sflag, size = 0x4, scoped, tag = 'scoped memory for tpu_custom_call.1']
    #allocation17 [shape = 'u8[512]{0}', space=vmem, size = 0x400, scoped, tag = 'output window, operand 2, single buffered']
    %14 = vsyncpa [#allocation7], 0
    %15 = vsyncpa [#allocation10], 0
    %16 = vsyncpa [#allocation13], 0
    %17 = vsyncpa [#allocation8], 0
    %18 = vsyncpa [#allocation16], 0
    // Predicated region
    $region2: #{tpu_custom_call.1} parent=1 // pred_check
      _
    $region3: #{tpu_custom_call.1} parent=1 // pred_check_branch
      %20 = sbr.rel (0) target = $region5
    $region4: #{tpu_custom_call.1} parent=1 // pred_region
      %s22 = ssub.s32 128, 128
      %23 = vsyncadd [#allocation7], %s22
      %s25 = sshll.u32 [#allocation6], 4
      %s26 = int_to_ptr.vmem [resolvable:$true] %s25
      %28 = dma.hbm_to_vmem [thread:$0]  %s0, 128, %s26, [#allocation7]
    $region5: #{tpu_custom_call.1} parent=1 // pred_fallthru
      _
    // Predicated region
    $region6: #{tpu_custom_call.1} parent=1 // pred_check
      _
    $region7: #{tpu_custom_call.1} parent=1 // pred_check_branch
      %30 = sbr.rel (0) target = $region9
    $region8: #{tpu_custom_call.1} parent=1 // pred_region
      %s32 = ssub.s32 384, 384
      %33 = vsyncadd [#allocation10], %s32
      %s34 = sshll.u32 [#allocation9], 4
      %s35 = int_to_ptr.vmem [resolvable:$true] %s34
      %40 = dma.hbm_to_vmem [thread:$0]  %s1, 384, %s35, [#allocation10], 128, 128, 8
    $region9: #{tpu_custom_call.1} parent=1 // pred_fallthru
      _
    // Predicated region
    $region10: #{tpu_custom_call.1} parent=1 // pred_check
      _
    $region11: #{tpu_custom_call.1} parent=1 // pred_check_branch
      %42 = sbr.rel (0) target = $region13
    $region12: #{tpu_custom_call.1} parent=1 // pred_region
      _
    $region13: #{tpu_custom_call.1} parent=1 // pred_fallthru
      _
    // Predicated region
    $region14: #{tpu_custom_call.1} parent=1 // pred_check
      _
    $region15: #{tpu_custom_call.1} parent=1 // pred_check_branch
      %44 = sbr.rel (0) target = $region17
    $region16: #{tpu_custom_call.1} parent=1 // pred_region
      %s46 = ssub.s32 512, 512
      %47 = vsyncadd [#allocation10], %s46
      %s48 = sshll.u32 [#allocation11], 4
      %s49 = int_to_ptr.vmem [resolvable:$true] %s48
      %54 = dma.hbm_to_vmem [thread:$0]  %s3, 512, %s49, [#allocation10], 128, 128, 8
    $region17: #{tpu_custom_call.1} parent=1 // pred_fallthru
      _
    // Predicated region
    $region18: #{tpu_custom_call.1} parent=1 // pred_check
      _
    $region19: #{tpu_custom_call.1} parent=1 // pred_check_branch
      %56 = sbr.rel (0) target = $region21
    $region20: #{tpu_custom_call.1} parent=1 // pred_region
      %s58 = ssub.s32 512, 512
      %59 = vsyncadd [#allocation13], %s58
      %s60 = sshll.u32 [#allocation12], 4
      %s61 = int_to_ptr.vmem [resolvable:$true] %s60
      %66 = dma.hbm_to_vmem [thread:$0]  %s4, 512, %s61, [#allocation13], 128, 128, 8
    $region21: #{tpu_custom_call.1} parent=1 // pred_fallthru
      _
    // Predicated region
    $region22: #{tpu_custom_call.1} parent=1 // pred_check
      _
    $region23: #{tpu_custom_call.1} parent=1 // pred_check_branch
      %68 = sbr.rel (0) target = $region25
    $region24: #{tpu_custom_call.1} parent=1 // pred_region
      _
    $region25: #{tpu_custom_call.1} parent=1 // pred_fallthru
      _
    // Predicated region
    $region26: #{tpu_custom_call.1} parent=1 // pred_check
      _
    $region27: #{tpu_custom_call.1} parent=1 // pred_check_branch
      %70 = sbr.rel (0) target = $region29
    $region28: #{tpu_custom_call.1} parent=1 // pred_region
      %71 = dma.done [#allocation7], 128
    $region29: #{tpu_custom_call.1} parent=1 // pred_fallthru
      _
    // Predicated region
    $region30: #{tpu_custom_call.1} parent=1 // pred_check
      _
    $region31: #{tpu_custom_call.1} parent=1 // pred_check_branch
      %73 = sbr.rel (0) target = $region33
    $region32: #{tpu_custom_call.1} parent=1 // pred_region
      %74 = dma.done [#allocation10], 384
    $region33: #{tpu_custom_call.1} parent=1 // pred_fallthru
      _
    // Predicated region
    $region34: #{tpu_custom_call.1} parent=1 // pred_check
      _
    $region35: #{tpu_custom_call.1} parent=1 // pred_check_branch
      %76 = sbr.rel (0) target = $region37
    $region36: #{tpu_custom_call.1} parent=1 // pred_region
      %77 = dma.done [#allocation10], 512
    $region37: #{tpu_custom_call.1} parent=1 // pred_fallthru
      _
    // Predicated region
    $region38: #{tpu_custom_call.1} parent=1 // pred_check
      _
    $region39: #{tpu_custom_call.1} parent=1 // pred_check_branch
      %79 = sbr.rel (0) target = $region41
    $region40: #{tpu_custom_call.1} parent=1 // pred_region
      %80 = dma.done [#allocation13], 512
    $region41: #{tpu_custom_call.1} parent=1 // pred_fallthru
      _
    %p81 = scmp.eq.s32.totalorder 0, 0
    // Predicated region
    $region42: #{tpu_custom_call.1} parent=1 // pred_check
      %p82 = pneg %p81
    $region43: #{tpu_custom_call.1} parent=1 // pred_check_branch
      %84 = sbr.rel (%p82) target = $region45
    $region44: #{tpu_custom_call.1} parent=1 // pred_region
      %vm85 = vcmask 253952
      %86 = vst.msk [vmem:[#allocation4] sm:$0x1] %vm85, 0.0
      %87 = vst.msk [vmem:[#allocation5] sm:$0x1] %vm85, 0.0
    $region45: #{tpu_custom_call.1} parent=1 // pred_fallthru
      _
    %v88 = vld [vmem:[#allocation6] sm:$0xff]
    %v89 = vld [vmem:[#allocation9] sm:$0xff]
    %v90 = vld [vmem:[#allocation9 + $0x8] sm:$0xff]
    %v91 = vld [vmem:[#allocation9 + $0x10] sm:$0xf]
    %v92 = vld [vmem:[%s2] sm:$0x1]
    %v94 = vlaneseq
    %v95 = vshrl.u32 %v94, 7
    %v96 = vsub.s32 0, %v95
    %v97 = vrot.slane %v92, %v96
    %vm99 = vcmask 162816
    %v101 = vsel %vm99, %v88, 0
    %vm103 = vcmask 1043456
    %v105 = vsel %vm103, %v91, 0
    %107 = vmatprep.subr.mxu0 0.0
    %108 = vmatpush1.msra.mxu0 %v89
    %109 = vmatprep.subr.mxu0 0.0
    %110 = vmatpush1.msra.mxu0 %v90
    %111 = vmatprep.subr.mxu0 0.0
    %112 = vmatpush1.msra.mxu0 %v105
    %113 = vmatprep.subr.mxu0 0.0
    %114 = vmatpush1.msra.mxu0 0.0
    %115 = vmatprep.subr.mxu0 0.0
    %116 = vmatpush1.msra.mxu0 0.0
    %117 = vmatprep.subr.mxu0 0.0
    %118 = vmatpush1.msra.mxu0 0.0
    %119 = vmatprep.subr.mxu0 0.0
    %120 = vmatpush1.msra.mxu0 0.0
    %121 = vmatprep.subr.mxu0 0.0
    %122 = vmatpush1.msra.mxu0 0.0
    %123 = vmatprep.subr.mxu0 0.0
    %124 = vmatpush1.msra.mxu0 0.0
    %125 = vmatprep.subr.mxu0 0.0
    %126 = vmatpush1.msra.mxu0 0.0
    %127 = vmatprep.subr.mxu0 0.0
    %128 = vmatpush1.msra.mxu0 0.0
    %129 = vmatprep.subr.mxu0 0.0
    %130 = vmatpush1.msra.mxu0 0.0
    %131 = vmatprep.subr.mxu0 0.0
    %132 = vmatpush1.msra.mxu0 0.0
    %133 = vmatprep.subr.mxu0 0.0
    %134 = vmatpush1.msra.mxu0 0.0
    %135 = vmatprep.subr.mxu0 0.0
    %136 = vmatpush1.msra.mxu0 0.0
    %137 = vmatprep.subr.mxu0 0.0
    %138 = vmatpush1.msra.mxu0 0.0
    %139 = vmatprep.subr.mxu0 0.0
    %140 = vmatpush1.msra.mxu0 0.0
    %141 = vmatprep.subr.mxu0 0.0
    %142 = vmatpush1.msra.mxu0 0.0
    %143 = vmatprep.subr.mxu0 0.0
    %144 = vmatpush1.msra.mxu0 0.0
    %145 = vmatprep.subr.mxu0 0.0
    %146 = vmatpush1.msra.mxu0 0.0
    %147 = vmatprep.subr.mxu0 0.0
    %148 = vmatpush1.msra.mxu0 0.0
    %149 = vmatprep.subr.mxu0 0.0
    %150 = vmatpush1.msra.mxu0 0.0
    %151 = vmatprep.subr.mxu0 0.0
    %152 = vmatpush1.msra.mxu0 0.0
    %153 = vmatprep.subr.mxu0 0.0
    %154 = vmatpush1.msra.mxu0 0.0
    %155 = vmatprep.subr.mxu0 0.0
    %156 = vmatpush1.msra.mxu0 0.0
    %157 = vmatprep.subr.mxu0 0.0
    %158 = vmatpush1.msra.mxu0 0.0
    %159 = vmatprep.subr.mxu0 0.0
    %160 = vmatpush1.msra.mxu0 0.0
    %161 = vmatprep.subr.mxu0 0.0
    %162 = vmatpush1.msra.mxu0 0.0
    %163 = vmatprep.subr.mxu0 0.0
    %164 = vmatpush1.msra.mxu0 0.0
    %165 = vmatprep.subr.mxu0 0.0
    %166 = vmatpush1.msra.mxu0 0.0
    %167 = vmatprep.subr.mxu0 0.0
    %168 = vmatpush1.msra.mxu0 0.0
    %169 = vmatprep.subr.mxu0 0.0
    %170 = vmatpush1.msra.mxu0 0.0
    %171 = vmatprep.mubr.f32.mxu0 0.0
    %172 = vmatmul.mubr.f32.gmra.mrb[0].mxu0 %v101
    %v173 = vpop.f32.mrb[0].mxu0
    %v174 = vadd.f32 %v97, %v173
    %v175 = vpop.f32.mrb[0].mxu0
    %176 = vdwg.mxu0
    %177 = vst [vmem:[#allocation2] sm:$0xff] %v174
    %v178 = vld [vmem:[#allocation11] sm:$0xff]
    %v179 = vld [vmem:[#allocation11 + $0x8] sm:$0xff]
    %v180 = vld [vmem:[#allocation11 + $0x10] sm:$0xff]
    %v181 = vld [vmem:[#allocation11 + $0x18] sm:$0xff]
    %v182 = vld [vmem:[#allocation4] sm:$0x1]
    %v183 = vld [vmem:[#allocation5] sm:$0x1]
    %v184 = vld [vmem:[#allocation2] sm:$0x1]
    %vm185 = vcmask 261120
    %v187 = vsel %vm185, %v182, 0
    %189 = vmatprep.subr.mxu0 0.0
    %190 = vmatpush1.msra.mxu0 %v178
    %191 = vmatprep.subr.mxu0 0.0
    %192 = vmatpush1.msra.mxu0 %v179
    %193 = vmatprep.subr.mxu0 0.0
    %194 = vmatpush1.msra.mxu0 %v180
    %195 = vmatprep.subr.mxu0 0.0
    %196 = vmatpush1.msra.mxu0 %v181
    %197 = vmatprep.subr.mxu0 0.0
    %198 = vmatpush1.msra.mxu0 0.0
    %199 = vmatprep.subr.mxu0 0.0
    %200 = vmatpush1.msra.mxu0 0.0
    %201 = vmatprep.subr.mxu0 0.0
    %202 = vmatpush1.msra.mxu0 0.0
    %203 = vmatprep.subr.mxu0 0.0
    %204 = vmatpush1.msra.mxu0 0.0
    %205 = vmatprep.subr.mxu0 0.0
    %206 = vmatpush1.msra.mxu0 0.0
    %207 = vmatprep.subr.mxu0 0.0
    %208 = vmatpush1.msra.mxu0 0.0
    %209 = vmatprep.subr.mxu0 0.0
    %210 = vmatpush1.msra.mxu0 0.0
    %211 = vmatprep.subr.mxu0 0.0
    %212 = vmatpush1.msra.mxu0 0.0
    %213 = vmatprep.subr.mxu0 0.0
    %214 = vmatpush1.msra.mxu0 0.0
    %215 = vmatprep.subr.mxu0 0.0
    %216 = vmatpush1.msra.mxu0 0.0
    %217 = vmatprep.subr.mxu0 0.0
    %218 = vmatpush1.msra.mxu0 0.0
    %219 = vmatprep.subr.mxu0 0.0
    %220 = vmatpush1.msra.mxu0 0.0
    %221 = vmatprep.subr.mxu0 0.0
    %222 = vmatpush1.msra.mxu0 0.0
    %223 = vmatprep.subr.mxu0 0.0
    %224 = vmatpush1.msra.mxu0 0.0
    %225 = vmatprep.subr.mxu0 0.0
    %226 = vmatpush1.msra.mxu0 0.0
    %227 = vmatprep.subr.mxu0 0.0
    %228 = vmatpush1.msra.mxu0 0.0
    %229 = vmatprep.subr.mxu0 0.0
    %230 = vmatpush1.msra.mxu0 0.0
    %231 = vmatprep.subr.mxu0 0.0
    %232 = vmatpush1.msra.mxu0 0.0
    %233 = vmatprep.subr.mxu0 0.0
    %234 = vmatpush1.msra.mxu0 0.0
    %235 = vmatprep.subr.mxu0 0.0
    %236 = vmatpush1.msra.mxu0 0.0
    %237 = vmatprep.subr.mxu0 0.0
    %238 = vmatpush1.msra.mxu0 0.0
    %239 = vmatprep.subr.mxu0 0.0
    %240 = vmatpush1.msra.mxu0 0.0
    %241 = vmatprep.subr.mxu0 0.0
    %242 = vmatpush1.msra.mxu0 0.0
    %243 = vmatprep.subr.mxu0 0.0
    %244 = vmatpush1.msra.mxu0 0.0
    %245 = vmatprep.subr.mxu0 0.0
    %246 = vmatpush1.msra.mxu0 0.0
    %247 = vmatprep.subr.mxu0 0.0
    %248 = vmatpush1.msra.mxu0 0.0
    %249 = vmatprep.subr.mxu0 0.0
    %250 = vmatpush1.msra.mxu0 0.0
    %251 = vmatprep.subr.mxu0 0.0
    %252 = vmatpush1.msra.mxu0 0.0
    %253 = vmatprep.mubr.f32.mxu0 0.0
    %254 = vmatmul.mubr.f32.gmra.mrb[0].mxu0 %v187
    %v255 = vpop.f32.mrb[0].mxu0
    %v256 = vadd.f32 0.0, %v255
    %v257 = vpop.f32.mrb[0].mxu0
    %258 = vdwg.mxu0
    %v259 = vadd.f32 %v184, %v256
    %v260 = vxor.u32 %v259, 2147483648
    %v261 = vmul.f32 %v260, 1.442695
    %v262 = vpow.pop %v261
    %v263 = vadd.f32 %v262, 1.0
    %v264 = vrcp.pop %v263
    %v265 = vmul.f32 1.0, %v264
    %v266 = vtanh.pop %v259
    %v268 = vlaneseq
    %v269 = vshrl.u32 %v268, 7
    %v270 = vsub.s32 0, %v269
    %v271 = vrot.slane %v183, %v270
    %272 = vrot.lane.b32.xlu0 %v271, 32
    %v273 = vpop.permute.xlu0 %272
    %v275 = vmul.f32 %v265, %v273
    %277 = vrot.lane.b32.xlu0 %v266, 64
    %v278 = vpop.permute.xlu0 %277
    %v280 = vmul.f32 %v265, %v278
    %282 = vrot.lane.b32.xlu0 %v280, 32
    %v283 = vpop.permute.xlu0 %282
    %v285 = vadd.f32 %v275, %v283
    %v286 = vtanh.pop %v285
    %288 = vrot.lane.b32.xlu0 %v286, 64
    %v289 = vpop.permute.xlu0 %288
    %v291 = vmul.f32 %v265, %v289
    %293 = vrot.lane.b32.xlu0 %v291, 32
    %v294 = vpop.permute.xlu0 %293
    %vm296 = vcmask 253952
    %297 = vst.msk [vmem:[#allocation3] sm:$0x1] %vm296, %v294
    %s298 = scalar_lea.vmem [#allocation2], 1
    %v299 = vld [vmem:[%s298] sm:$0x1]
    %v300 = vsel %vm185, %v294, 0
    %302 = vmatprep.subr.mxu0 0.0
    %303 = vmatpush1.msra.mxu0 %v178
    %304 = vmatprep.subr.mxu0 0.0
    %305 = vmatpush1.msra.mxu0 %v179
    %306 = vmatprep.subr.mxu0 0.0
    %307 = vmatpush1.msra.mxu0 %v180
    %308 = vmatprep.subr.mxu0 0.0
    %309 = vmatpush1.msra.mxu0 %v181
    %310 = vmatprep.subr.mxu0 0.0
    %311 = vmatpush1.msra.mxu0 0.0
    %312 = vmatprep.subr.mxu0 0.0
    %313 = vmatpush1.msra.mxu0 0.0
    %314 = vmatprep.subr.mxu0 0.0
    %315 = vmatpush1.msra.mxu0 0.0
    %316 = vmatprep.subr.mxu0 0.0
    %317 = vmatpush1.msra.mxu0 0.0
    %318 = vmatprep.subr.mxu0 0.0
    %319 = vmatpush1.msra.mxu0 0.0
    %320 = vmatprep.subr.mxu0 0.0
    %321 = vmatpush1.msra.mxu0 0.0
    %322 = vmatprep.subr.mxu0 0.0
    %323 = vmatpush1.msra.mxu0 0.0
    %324 = vmatprep.subr.mxu0 0.0
    %325 = vmatpush1.msra.mxu0 0.0
    %326 = vmatprep.subr.mxu0 0.0
    %327 = vmatpush1.msra.mxu0 0.0
    %328 = vmatprep.subr.mxu0 0.0
    %329 = vmatpush1.msra.mxu0 0.0
    %330 = vmatprep.subr.mxu0 0.0
    %331 = vmatpush1.msra.mxu0 0.0
    %332 = vmatprep.subr.mxu0 0.0
    %333 = vmatpush1.msra.mxu0 0.0
    %334 = vmatprep.subr.mxu0 0.0
    %335 = vmatpush1.msra.mxu0 0.0
    %336 = vmatprep.subr.mxu0 0.0
    %337 = vmatpush1.msra.mxu0 0.0
    %338 = vmatprep.subr.mxu0 0.0
    %339 = vmatpush1.msra.mxu0 0.0
    %340 = vmatprep.subr.mxu0 0.0
    %341 = vmatpush1.msra.mxu0 0.0
    %342 = vmatprep.subr.mxu0 0.0
    %343 = vmatpush1.msra.mxu0 0.0
    %344 = vmatprep.subr.mxu0 0.0
    %345 = vmatpush1.msra.mxu0 0.0
    %346 = vmatprep.subr.mxu0 0.0
    %347 = vmatpush1.msra.mxu0 0.0
    %348 = vmatprep.subr.mxu0 0.0
    %349 = vmatpush1.msra.mxu0 0.0
    %350 = vmatprep.subr.mxu0 0.0
    %351 = vmatpush1.msra.mxu0 0.0
    %352 = vmatprep.subr.mxu0 0.0
    %353 = vmatpush1.msra.mxu0 0.0
    %354 = vmatprep.subr.mxu0 0.0
    %355 = vmatpush1.msra.mxu0 0.0
    %356 = vmatprep.subr.mxu0 0.0
    %357 = vmatpush1.msra.mxu0 0.0
    %358 = vmatprep.subr.mxu0 0.0
    %359 = vmatpush1.msra.mxu0 0.0
    %360 = vmatprep.subr.mxu0 0.0
    %361 = vmatpush1.msra.mxu0 0.0
    %362 = vmatprep.subr.mxu0 0.0
    %363 = vmatpush1.msra.mxu0 0.0
    %364 = vmatprep.subr.mxu0 0.0
    %365 = vmatpush1.msra.mxu0 0.0
    %366 = vmatprep.mubr.f32.mxu0 0.0
    %367 = vmatmul.mubr.f32.gmra.mrb[0].mxu0 %v300
    %v368 = vpop.f32.mrb[0].mxu0
    %v369 = vadd.f32 0.0, %v368
    %v370 = vpop.f32.mrb[0].mxu0
    %371 = vdwg.mxu0
    %v372 = vadd.f32 %v299, %v369
    %v373 = vxor.u32 %v372, 2147483648
    %v374 = vmul.f32 %v373, 1.442695
    %v375 = vpow.pop %v374
    %v376 = vadd.f32 %v375, 1.0
    %v377 = vrcp.pop %v376
    %v378 = vmul.f32 1.0, %v377
    %v379 = vtanh.pop %v372
    %v380 = vmul.f32 %v378, %v285
    %382 = vrot.lane.b32.xlu0 %v379, 64
    %v383 = vpop.permute.xlu0 %382
    %v385 = vmul.f32 %v378, %v383
    %387 = vrot.lane.b32.xlu0 %v385, 32
    %v388 = vpop.permute.xlu0 %387
    %v390 = vadd.f32 %v380, %v388
    %v391 = vtanh.pop %v390
    %393 = vrot.lane.b32.xlu0 %v391, 64
    %v394 = vpop.permute.xlu0 %393
    %v396 = vmul.f32 %v378, %v394
    %398 = vrot.lane.b32.xlu0 %v396, 32
    %v399 = vpop.permute.xlu0 %398
    %s401 = scalar_lea.vmem [#allocation3], 1
    %402 = vst.msk [vmem:[%s401] sm:$0x1] %vm296, %v399
    %s403 = scalar_lea.vmem [#allocation2], 2
    %v404 = vld [vmem:[%s403] sm:$0x1]
    %v405 = vsel %vm185, %v399, 0
    %407 = vmatprep.subr.mxu0 0.0
    %408 = vmatpush1.msra.mxu0 %v178
    %409 = vmatprep.subr.mxu0 0.0
    %410 = vmatpush1.msra.mxu0 %v179
    %411 = vmatprep.subr.mxu0 0.0
    %412 = vmatpush1.msra.mxu0 %v180
    %413 = vmatprep.subr.mxu0 0.0
    %414 = vmatpush1.msra.mxu0 %v181
    %415 = vmatprep.subr.mxu0 0.0
    %416 = vmatpush1.msra.mxu0 0.0
    %417 = vmatprep.subr.mxu0 0.0
    %418 = vmatpush1.msra.mxu0 0.0
    %419 = vmatprep.subr.mxu0 0.0
    %420 = vmatpush1.msra.mxu0 0.0
    %421 = vmatprep.subr.mxu0 0.0
    %422 = vmatpush1.msra.mxu0 0.0
    %423 = vmatprep.subr.mxu0 0.0
    %424 = vmatpush1.msra.mxu0 0.0
    %425 = vmatprep.subr.mxu0 0.0
    %426 = vmatpush1.msra.mxu0 0.0
    %427 = vmatprep.subr.mxu0 0.0
    %428 = vmatpush1.msra.mxu0 0.0
    %429 = vmatprep.subr.mxu0 0.0
    %430 = vmatpush1.msra.mxu0 0.0
    %431 = vmatprep.subr.mxu0 0.0
    %432 = vmatpush1.msra.mxu0 0.0
    %433 = vmatprep.subr.mxu0 0.0
    %434 = vmatpush1.msra.mxu0 0.0
    %435 = vmatprep.subr.mxu0 0.0
    %436 = vmatpush1.msra.mxu0 0.0
    %437 = vmatprep.subr.mxu0 0.0
    %438 = vmatpush1.msra.mxu0 0.0
    %439 = vmatprep.subr.mxu0 0.0
    %440 = vmatpush1.msra.mxu0 0.0
    %441 = vmatprep.subr.mxu0 0.0
    %442 = vmatpush1.msra.mxu0 0.0
    %443 = vmatprep.subr.mxu0 0.0
    %444 = vmatpush1.msra.mxu0 0.0
    %445 = vmatprep.subr.mxu0 0.0
    %446 = vmatpush1.msra.mxu0 0.0
    %447 = vmatprep.subr.mxu0 0.0
    %448 = vmatpush1.msra.mxu0 0.0
    %449 = vmatprep.subr.mxu0 0.0
    %450 = vmatpush1.msra.mxu0 0.0
    %451 = vmatprep.subr.mxu0 0.0
    %452 = vmatpush1.msra.mxu0 0.0
    %453 = vmatprep.subr.mxu0 0.0
    %454 = vmatpush1.msra.mxu0 0.0
    %455 = vmatprep.subr.mxu0 0.0
    %456 = vmatpush1.msra.mxu0 0.0
    %457 = vmatprep.subr.mxu0 0.0
    %458 = vmatpush1.msra.mxu0 0.0
    %459 = vmatprep.subr.mxu0 0.0
    %460 = vmatpush1.msra.mxu0 0.0
    %461 = vmatprep.subr.mxu0 0.0
    %462 = vmatpush1.msra.mxu0 0.0
    %463 = vmatprep.subr.mxu0 0.0
    %464 = vmatpush1.msra.mxu0 0.0
    %465 = vmatprep.subr.mxu0 0.0
    %466 = vmatpush1.msra.mxu0 0.0
    %467 = vmatprep.subr.mxu0 0.0
    %468 = vmatpush1.msra.mxu0 0.0
    %469 = vmatprep.subr.mxu0 0.0
    %470 = vmatpush1.msra.mxu0 0.0
    %471 = vmatprep.mubr.f32.mxu0 0.0
    %472 = vmatmul.mubr.f32.gmra.mrb[0].mxu0 %v405
    %v473 = vpop.f32.mrb[0].mxu0
    %v474 = vadd.f32 0.0, %v473
    %v475 = vpop.f32.mrb[0].mxu0
    %476 = vdwg.mxu0
    %v477 = vadd.f32 %v404, %v474
    %v478 = vxor.u32 %v477, 2147483648
    %v479 = vmul.f32 %v478, 1.442695
    %v480 = vpow.pop %v479
    %v481 = vadd.f32 %v480, 1.0
    %v482 = vrcp.pop %v481
    %v483 = vmul.f32 1.0, %v482
    %v484 = vtanh.pop %v477
    %v485 = vmul.f32 %v483, %v390
    %487 = vrot.lane.b32.xlu0 %v484, 64
    %v488 = vpop.permute.xlu0 %487
    %v490 = vmul.f32 %v483, %v488
    %492 = vrot.lane.b32.xlu0 %v490, 32
    %v493 = vpop.permute.xlu0 %492
    %v495 = vadd.f32 %v485, %v493
    %v496 = vtanh.pop %v495
    %498 = vrot.lane.b32.xlu0 %v496, 64
    %v499 = vpop.permute.xlu0 %498
    %v501 = vmul.f32 %v483, %v499
    %503 = vrot.lane.b32.xlu0 %v501, 32
    %v504 = vpop.permute.xlu0 %503
    %s506 = scalar_lea.vmem [#allocation3], 2
    %507 = vst.msk [vmem:[%s506] sm:$0x1] %vm296, %v504
    %s508 = scalar_lea.vmem [#allocation2], 3
    %v509 = vld [vmem:[%s508] sm:$0x1]
    %v510 = vsel %vm185, %v504, 0
    %512 = vmatprep.subr.mxu0 0.0
    %513 = vmatpush1.msra.mxu0 %v178
    %514 = vmatprep.subr.mxu0 0.0
    %515 = vmatpush1.msra.mxu0 %v179
    %516 = vmatprep.subr.mxu0 0.0
    %517 = vmatpush1.msra.mxu0 %v180
    %518 = vmatprep.subr.mxu0 0.0
    %519 = vmatpush1.msra.mxu0 %v181
    %520 = vmatprep.subr.mxu0 0.0
    %521 = vmatpush1.msra.mxu0 0.0
    %522 = vmatprep.subr.mxu0 0.0
    %523 = vmatpush1.msra.mxu0 0.0
    %524 = vmatprep.subr.mxu0 0.0
    %525 = vmatpush1.msra.mxu0 0.0
    %526 = vmatprep.subr.mxu0 0.0
    %527 = vmatpush1.msra.mxu0 0.0
    %528 = vmatprep.subr.mxu0 0.0
    %529 = vmatpush1.msra.mxu0 0.0
    %530 = vmatprep.subr.mxu0 0.0
    %531 = vmatpush1.msra.mxu0 0.0
    %532 = vmatprep.subr.mxu0 0.0
    %533 = vmatpush1.msra.mxu0 0.0
    %534 = vmatprep.subr.mxu0 0.0
    %535 = vmatpush1.msra.mxu0 0.0
    %536 = vmatprep.subr.mxu0 0.0
    %537 = vmatpush1.msra.mxu0 0.0
    %538 = vmatprep.subr.mxu0 0.0
    %539 = vmatpush1.msra.mxu0 0.0
    %540 = vmatprep.subr.mxu0 0.0
    %541 = vmatpush1.msra.mxu0 0.0
    %542 = vmatprep.subr.mxu0 0.0
    %543 = vmatpush1.msra.mxu0 0.0
    %544 = vmatprep.subr.mxu0 0.0
    %545 = vmatpush1.msra.mxu0 0.0
    %546 = vmatprep.subr.mxu0 0.0
    %547 = vmatpush1.msra.mxu0 0.0
    %548 = vmatprep.subr.mxu0 0.0
    %549 = vmatpush1.msra.mxu0 0.0
    %550 = vmatprep.subr.mxu0 0.0
    %551 = vmatpush1.msra.mxu0 0.0
    %552 = vmatprep.subr.mxu0 0.0
    %553 = vmatpush1.msra.mxu0 0.0
    %554 = vmatprep.subr.mxu0 0.0
    %555 = vmatpush1.msra.mxu0 0.0
    %556 = vmatprep.subr.mxu0 0.0
    %557 = vmatpush1.msra.mxu0 0.0
    %558 = vmatprep.subr.mxu0 0.0
    %559 = vmatpush1.msra.mxu0 0.0
    %560 = vmatprep.subr.mxu0 0.0
    %561 = vmatpush1.msra.mxu0 0.0
    %562 = vmatprep.subr.mxu0 0.0
    %563 = vmatpush1.msra.mxu0 0.0
    %564 = vmatprep.subr.mxu0 0.0
    %565 = vmatpush1.msra.mxu0 0.0
    %566 = vmatprep.subr.mxu0 0.0
    %567 = vmatpush1.msra.mxu0 0.0
    %568 = vmatprep.subr.mxu0 0.0
    %569 = vmatpush1.msra.mxu0 0.0
    %570 = vmatprep.subr.mxu0 0.0
    %571 = vmatpush1.msra.mxu0 0.0
    %572 = vmatprep.subr.mxu0 0.0
    %573 = vmatpush1.msra.mxu0 0.0
    %574 = vmatprep.subr.mxu0 0.0
    %575 = vmatpush1.msra.mxu0 0.0
    %576 = vmatprep.mubr.f32.mxu0 0.0
    %577 = vmatmul.mubr.f32.gmra.mrb[0].mxu0 %v510
    %v578 = vpop.f32.mrb[0].mxu0
    %v579 = vadd.f32 0.0, %v578
    %v580 = vpop.f32.mrb[0].mxu0
    %581 = vdwg.mxu0
    %v582 = vadd.f32 %v509, %v579
    %v583 = vxor.u32 %v582, 2147483648
    %v584 = vmul.f32 %v583, 1.442695
    %v585 = vpow.pop %v584
    %v586 = vadd.f32 %v585, 1.0
    %v587 = vrcp.pop %v586
    %v588 = vmul.f32 1.0, %v587
    %v589 = vtanh.pop %v582
    %v590 = vmul.f32 %v588, %v495
    %592 = vrot.lane.b32.xlu0 %v589, 64
    %v593 = vpop.permute.xlu0 %592
    %v595 = vmul.f32 %v588, %v593
    %597 = vrot.lane.b32.xlu0 %v595, 32
    %v598 = vpop.permute.xlu0 %597
    %v600 = vadd.f32 %v590, %v598
    %v601 = vtanh.pop %v600
    %603 = vrot.lane.b32.xlu0 %v601, 64
    %v604 = vpop.permute.xlu0 %603
    %v606 = vmul.f32 %v588, %v604
    %608 = vrot.lane.b32.xlu0 %v606, 32
    %v609 = vpop.permute.xlu0 %608
    %s611 = scalar_lea.vmem [#allocation3], 3
    %612 = vst.msk [vmem:[%s611] sm:$0x1] %vm296, %v609
    %s613 = scalar_lea.vmem [#allocation2], 4
    %v614 = vld [vmem:[%s613] sm:$0x1]
    %v615 = vsel %vm185, %v609, 0
    %617 = vmatprep.subr.mxu0 0.0
    %618 = vmatpush1.msra.mxu0 %v178
    %619 = vmatprep.subr.mxu0 0.0
    %620 = vmatpush1.msra.mxu0 %v179
    %621 = vmatprep.subr.mxu0 0.0
    %622 = vmatpush1.msra.mxu0 %v180
    %623 = vmatprep.subr.mxu0 0.0
    %624 = vmatpush1.msra.mxu0 %v181
    %625 = vmatprep.subr.mxu0 0.0
    %626 = vmatpush1.msra.mxu0 0.0
    %627 = vmatprep.subr.mxu0 0.0
    %628 = vmatpush1.msra.mxu0 0.0
    %629 = vmatprep.subr.mxu0 0.0
    %630 = vmatpush1.msra.mxu0 0.0
    %631 = vmatprep.subr.mxu0 0.0
    %632 = vmatpush1.msra.mxu0 0.0
    %633 = vmatprep.subr.mxu0 0.0
    %634 = vmatpush1.msra.mxu0 0.0
    %635 = vmatprep.subr.mxu0 0.0
    %636 = vmatpush1.msra.mxu0 0.0
    %637 = vmatprep.subr.mxu0 0.0
    %638 = vmatpush1.msra.mxu0 0.0
    %639 = vmatprep.subr.mxu0 0.0
    %640 = vmatpush1.msra.mxu0 0.0
    %641 = vmatprep.subr.mxu0 0.0
    %642 = vmatpush1.msra.mxu0 0.0
    %643 = vmatprep.subr.mxu0 0.0
    %644 = vmatpush1.msra.mxu0 0.0
    %645 = vmatprep.subr.mxu0 0.0
    %646 = vmatpush1.msra.mxu0 0.0
    %647 = vmatprep.subr.mxu0 0.0
    %648 = vmatpush1.msra.mxu0 0.0
    %649 = vmatprep.subr.mxu0 0.0
    %650 = vmatpush1.msra.mxu0 0.0
    %651 = vmatprep.subr.mxu0 0.0
    %652 = vmatpush1.msra.mxu0 0.0
    %653 = vmatprep.subr.mxu0 0.0
    %654 = vmatpush1.msra.mxu0 0.0
    %655 = vmatprep.subr.mxu0 0.0
    %656 = vmatpush1.msra.mxu0 0.0
    %657 = vmatprep.subr.mxu0 0.0
    %658 = vmatpush1.msra.mxu0 0.0
    %659 = vmatprep.subr.mxu0 0.0
    %660 = vmatpush1.msra.mxu0 0.0
    %661 = vmatprep.subr.mxu0 0.0
    %662 = vmatpush1.msra.mxu0 0.0
    %663 = vmatprep.subr.mxu0 0.0
    %664 = vmatpush1.msra.mxu0 0.0
    %665 = vmatprep.subr.mxu0 0.0
    %666 = vmatpush1.msra.mxu0 0.0
    %667 = vmatprep.subr.mxu0 0.0
    %668 = vmatpush1.msra.mxu0 0.0
    %669 = vmatprep.subr.mxu0 0.0
    %670 = vmatpush1.msra.mxu0 0.0
    %671 = vmatprep.subr.mxu0 0.0
    %672 = vmatpush1.msra.mxu0 0.0
    %673 = vmatprep.subr.mxu0 0.0
    %674 = vmatpush1.msra.mxu0 0.0
    %675 = vmatprep.subr.mxu0 0.0
    %676 = vmatpush1.msra.mxu0 0.0
    %677 = vmatprep.subr.mxu0 0.0
    %678 = vmatpush1.msra.mxu0 0.0
    %679 = vmatprep.subr.mxu0 0.0
    %680 = vmatpush1.msra.mxu0 0.0
    %681 = vmatprep.mubr.f32.mxu0 0.0
    %682 = vmatmul.mubr.f32.gmra.mrb[0].mxu0 %v615
    %v683 = vpop.f32.mrb[0].mxu0
    %v684 = vadd.f32 0.0, %v683
    %v685 = vpop.f32.mrb[0].mxu0
    %686 = vdwg.mxu0
    %v687 = vadd.f32 %v614, %v684
    %v688 = vxor.u32 %v687, 2147483648
    %v689 = vmul.f32 %v688, 1.442695
    %v690 = vpow.pop %v689
    %v691 = vadd.f32 %v690, 1.0
    %v692 = vrcp.pop %v691
    %v693 = vmul.f32 1.0, %v692
    %v694 = vtanh.pop %v687
    %v695 = vmul.f32 %v693, %v600
    %697 = vrot.lane.b32.xlu0 %v694, 64
    %v698 = vpop.permute.xlu0 %697
    %v700 = vmul.f32 %v693, %v698
    %702 = vrot.lane.b32.xlu0 %v700, 32
    %v703 = vpop.permute.xlu0 %702
    %v705 = vadd.f32 %v695, %v703
    %v706 = vtanh.pop %v705
    %708 = vrot.lane.b32.xlu0 %v706, 64
    %v709 = vpop.permute.xlu0 %708
    %v711 = vmul.f32 %v693, %v709
    %713 = vrot.lane.b32.xlu0 %v711, 32
    %v714 = vpop.permute.xlu0 %713
    %s716 = scalar_lea.vmem [#allocation3], 4
    %717 = vst.msk [vmem:[%s716] sm:$0x1] %vm296, %v714
    %s718 = scalar_lea.vmem [#allocation2], 5
    %v719 = vld [vmem:[%s718] sm:$0x1]
    %v720 = vsel %vm185, %v714, 0
    %722 = vmatprep.subr.mxu0 0.0
    %723 = vmatpush1.msra.mxu0 %v178
    %724 = vmatprep.subr.mxu0 0.0
    %725 = vmatpush1.msra.mxu0 %v179
    %726 = vmatprep.subr.mxu0 0.0
    %727 = vmatpush1.msra.mxu0 %v180
    %728 = vmatprep.subr.mxu0 0.0
    %729 = vmatpush1.msra.mxu0 %v181
    %730 = vmatprep.subr.mxu0 0.0
    %731 = vmatpush1.msra.mxu0 0.0
    %732 = vmatprep.subr.mxu0 0.0
    %733 = vmatpush1.msra.mxu0 0.0
    %734 = vmatprep.subr.mxu0 0.0
    %735 = vmatpush1.msra.mxu0 0.0
    %736 = vmatprep.subr.mxu0 0.0
    %737 = vmatpush1.msra.mxu0 0.0
    %738 = vmatprep.subr.mxu0 0.0
    %739 = vmatpush1.msra.mxu0 0.0
    %740 = vmatprep.subr.mxu0 0.0
    %741 = vmatpush1.msra.mxu0 0.0
    %742 = vmatprep.subr.mxu0 0.0
    %743 = vmatpush1.msra.mxu0 0.0
    %744 = vmatprep.subr.mxu0 0.0
    %745 = vmatpush1.msra.mxu0 0.0
    %746 = vmatprep.subr.mxu0 0.0
    %747 = vmatpush1.msra.mxu0 0.0
    %748 = vmatprep.subr.mxu0 0.0
    %749 = vmatpush1.msra.mxu0 0.0
    %750 = vmatprep.subr.mxu0 0.0
    %751 = vmatpush1.msra.mxu0 0.0
    %752 = vmatprep.subr.mxu0 0.0
    %753 = vmatpush1.msra.mxu0 0.0
    %754 = vmatprep.subr.mxu0 0.0
    %755 = vmatpush1.msra.mxu0 0.0
    %756 = vmatprep.subr.mxu0 0.0
    %757 = vmatpush1.msra.mxu0 0.0
    %758 = vmatprep.subr.mxu0 0.0
    %759 = vmatpush1.msra.mxu0 0.0
    %760 = vmatprep.subr.mxu0 0.0
    %761 = vmatpush1.msra.mxu0 0.0
    %762 = vmatprep.subr.mxu0 0.0
    %763 = vmatpush1.msra.mxu0 0.0
    %764 = vmatprep.subr.mxu0 0.0
    %765 = vmatpush1.msra.mxu0 0.0
    %766 = vmatprep.subr.mxu0 0.0
    %767 = vmatpush1.msra.mxu0 0.0
    %768 = vmatprep.subr.mxu0 0.0
    %769 = vmatpush1.msra.mxu0 0.0
    %770 = vmatprep.subr.mxu0 0.0
    %771 = vmatpush1.msra.mxu0 0.0
    %772 = vmatprep.subr.mxu0 0.0
    %773 = vmatpush1.msra.mxu0 0.0
    %774 = vmatprep.subr.mxu0 0.0
    %775 = vmatpush1.msra.mxu0 0.0
    %776 = vmatprep.subr.mxu0 0.0
    %777 = vmatpush1.msra.mxu0 0.0
    %778 = vmatprep.subr.mxu0 0.0
    %779 = vmatpush1.msra.mxu0 0.0
    %780 = vmatprep.subr.mxu0 0.0
    %781 = vmatpush1.msra.mxu0 0.0
    %782 = vmatprep.subr.mxu0 0.0
    %783 = vmatpush1.msra.mxu0 0.0
    %784 = vmatprep.subr.mxu0 0.0
    %785 = vmatpush1.msra.mxu0 0.0
    %786 = vmatprep.mubr.f32.mxu0 0.0
    %787 = vmatmul.mubr.f32.gmra.mrb[0].mxu0 %v720
    %v788 = vpop.f32.mrb[0].mxu0
    %v789 = vadd.f32 0.0, %v788
    %v790 = vpop.f32.mrb[0].mxu0
    %791 = vdwg.mxu0
    %v792 = vadd.f32 %v719, %v789
    %v793 = vxor.u32 %v792, 2147483648
    %v794 = vmul.f32 %v793, 1.442695
    %v795 = vpow.pop %v794
    %v796 = vadd.f32 %v795, 1.0
    %v797 = vrcp.pop %v796
    %v798 = vmul.f32 1.0, %v797
    %v799 = vtanh.pop %v792
    %v800 = vmul.f32 %v798, %v705
    %802 = vrot.lane.b32.xlu0 %v799, 64
    %v803 = vpop.permute.xlu0 %802
    %v805 = vmul.f32 %v798, %v803
    %807 = vrot.lane.b32.xlu0 %v805, 32
    %v808 = vpop.permute.xlu0 %807
    %v810 = vadd.f32 %v800, %v808
    %v811 = vtanh.pop %v810
    %813 = vrot.lane.b32.xlu0 %v811, 64
    %v814 = vpop.permute.xlu0 %813
    %v816 = vmul.f32 %v798, %v814
    %818 = vrot.lane.b32.xlu0 %v816, 32
    %v819 = vpop.permute.xlu0 %818
    %s821 = scalar_lea.vmem [#allocation3], 5
    %822 = vst.msk [vmem:[%s821] sm:$0x1] %vm296, %v819
    %s823 = scalar_lea.vmem [#allocation2], 6
    %v824 = vld [vmem:[%s823] sm:$0x1]
    %v825 = vsel %vm185, %v819, 0
    %827 = vmatprep.subr.mxu0 0.0
    %828 = vmatpush1.msra.mxu0 %v178
    %829 = vmatprep.subr.mxu0 0.0
    %830 = vmatpush1.msra.mxu0 %v179
    %831 = vmatprep.subr.mxu0 0.0
    %832 = vmatpush1.msra.mxu0 %v180
    %833 = vmatprep.subr.mxu0 0.0
    %834 = vmatpush1.msra.mxu0 %v181
    %835 = vmatprep.subr.mxu0 0.0
    %836 = vmatpush1.msra.mxu0 0.0
    %837 = vmatprep.subr.mxu0 0.0
    %838 = vmatpush1.msra.mxu0 0.0
    %839 = vmatprep.subr.mxu0 0.0
    %840 = vmatpush1.msra.mxu0 0.0
    %841 = vmatprep.subr.mxu0 0.0
    %842 = vmatpush1.msra.mxu0 0.0
    %843 = vmatprep.subr.mxu0 0.0
    %844 = vmatpush1.msra.mxu0 0.0
    %845 = vmatprep.subr.mxu0 0.0
    %846 = vmatpush1.msra.mxu0 0.0
    %847 = vmatprep.subr.mxu0 0.0
    %848 = vmatpush1.msra.mxu0 0.0
    %849 = vmatprep.subr.mxu0 0.0
    %850 = vmatpush1.msra.mxu0 0.0
    %851 = vmatprep.subr.mxu0 0.0
    %852 = vmatpush1.msra.mxu0 0.0
    %853 = vmatprep.subr.mxu0 0.0
    %854 = vmatpush1.msra.mxu0 0.0
    %855 = vmatprep.subr.mxu0 0.0
    %856 = vmatpush1.msra.mxu0 0.0
    %857 = vmatprep.subr.mxu0 0.0
    %858 = vmatpush1.msra.mxu0 0.0
    %859 = vmatprep.subr.mxu0 0.0
    %860 = vmatpush1.msra.mxu0 0.0
    %861 = vmatprep.subr.mxu0 0.0
    %862 = vmatpush1.msra.mxu0 0.0
    %863 = vmatprep.subr.mxu0 0.0
    %864 = vmatpush1.msra.mxu0 0.0
    %865 = vmatprep.subr.mxu0 0.0
    %866 = vmatpush1.msra.mxu0 0.0
    %867 = vmatprep.subr.mxu0 0.0
    %868 = vmatpush1.msra.mxu0 0.0
    %869 = vmatprep.subr.mxu0 0.0
    %870 = vmatpush1.msra.mxu0 0.0
    %871 = vmatprep.subr.mxu0 0.0
    %872 = vmatpush1.msra.mxu0 0.0
    %873 = vmatprep.subr.mxu0 0.0
    %874 = vmatpush1.msra.mxu0 0.0
    %875 = vmatprep.subr.mxu0 0.0
    %876 = vmatpush1.msra.mxu0 0.0
    %877 = vmatprep.subr.mxu0 0.0
    %878 = vmatpush1.msra.mxu0 0.0
    %879 = vmatprep.subr.mxu0 0.0
    %880 = vmatpush1.msra.mxu0 0.0
    %881 = vmatprep.subr.mxu0 0.0
    %882 = vmatpush1.msra.mxu0 0.0
    %883 = vmatprep.subr.mxu0 0.0
    %884 = vmatpush1.msra.mxu0 0.0
    %885 = vmatprep.subr.mxu0 0.0
    %886 = vmatpush1.msra.mxu0 0.0
    %887 = vmatprep.subr.mxu0 0.0
    %888 = vmatpush1.msra.mxu0 0.0
    %889 = vmatprep.subr.mxu0 0.0
    %890 = vmatpush1.msra.mxu0 0.0
    %891 = vmatprep.mubr.f32.mxu0 0.0
    %892 = vmatmul.mubr.f32.gmra.mrb[0].mxu0 %v825
    %v893 = vpop.f32.mrb[0].mxu0
    %v894 = vadd.f32 0.0, %v893
    %v895 = vpop.f32.mrb[0].mxu0
    %896 = vdwg.mxu0
    %v897 = vadd.f32 %v824, %v894
    %v898 = vxor.u32 %v897, 2147483648
    %v899 = vmul.f32 %v898, 1.442695
    %v900 = vpow.pop %v899
    %v901 = vadd.f32 %v900, 1.0
    %v902 = vrcp.pop %v901
    %v903 = vmul.f32 1.0, %v902
    %v904 = vtanh.pop %v897
    %v905 = vmul.f32 %v903, %v810
    %907 = vrot.lane.b32.xlu0 %v904, 64
    %v908 = vpop.permute.xlu0 %907
    %v910 = vmul.f32 %v903, %v908
    %912 = vrot.lane.b32.xlu0 %v910, 32
    %v913 = vpop.permute.xlu0 %912
    %v915 = vadd.f32 %v905, %v913
    %v916 = vtanh.pop %v915
    %918 = vrot.lane.b32.xlu0 %v916, 64
    %v919 = vpop.permute.xlu0 %918
    %v921 = vmul.f32 %v903, %v919
    %923 = vrot.lane.b32.xlu0 %v921, 32
    %v924 = vpop.permute.xlu0 %923
    %s926 = scalar_lea.vmem [#allocation3], 6
    %927 = vst.msk [vmem:[%s926] sm:$0x1] %vm296, %v924
    %s928 = scalar_lea.vmem [#allocation2], 7
    %v929 = vld [vmem:[%s928] sm:$0x1]
    %v930 = vsel %vm185, %v924, 0
    %932 = vmatprep.subr.mxu0 0.0
    %933 = vmatpush1.msra.mxu0 %v178
    %934 = vmatprep.subr.mxu0 0.0
    %935 = vmatpush1.msra.mxu0 %v179
    %936 = vmatprep.subr.mxu0 0.0
    %937 = vmatpush1.msra.mxu0 %v180
    %938 = vmatprep.subr.mxu0 0.0
    %939 = vmatpush1.msra.mxu0 %v181
    %940 = vmatprep.subr.mxu0 0.0
    %941 = vmatpush1.msra.mxu0 0.0
    %942 = vmatprep.subr.mxu0 0.0
    %943 = vmatpush1.msra.mxu0 0.0
    %944 = vmatprep.subr.mxu0 0.0
    %945 = vmatpush1.msra.mxu0 0.0
    %946 = vmatprep.subr.mxu0 0.0
    %947 = vmatpush1.msra.mxu0 0.0
    %948 = vmatprep.subr.mxu0 0.0
    %949 = vmatpush1.msra.mxu0 0.0
    %950 = vmatprep.subr.mxu0 0.0
    %951 = vmatpush1.msra.mxu0 0.0
    %952 = vmatprep.subr.mxu0 0.0
    %953 = vmatpush1.msra.mxu0 0.0
    %954 = vmatprep.subr.mxu0 0.0
    %955 = vmatpush1.msra.mxu0 0.0
    %956 = vmatprep.subr.mxu0 0.0
    %957 = vmatpush1.msra.mxu0 0.0
    %958 = vmatprep.subr.mxu0 0.0
    %959 = vmatpush1.msra.mxu0 0.0
    %960 = vmatprep.subr.mxu0 0.0
    %961 = vmatpush1.msra.mxu0 0.0
    %962 = vmatprep.subr.mxu0 0.0
    %963 = vmatpush1.msra.mxu0 0.0
    %964 = vmatprep.subr.mxu0 0.0
    %965 = vmatpush1.msra.mxu0 0.0
    %966 = vmatprep.subr.mxu0 0.0
    %967 = vmatpush1.msra.mxu0 0.0
    %968 = vmatprep.subr.mxu0 0.0
    %969 = vmatpush1.msra.mxu0 0.0
    %970 = vmatprep.subr.mxu0 0.0
    %971 = vmatpush1.msra.mxu0 0.0
    %972 = vmatprep.subr.mxu0 0.0
    %973 = vmatpush1.msra.mxu0 0.0
    %974 = vmatprep.subr.mxu0 0.0
    %975 = vmatpush1.msra.mxu0 0.0
    %976 = vmatprep.subr.mxu0 0.0
    %977 = vmatpush1.msra.mxu0 0.0
    %978 = vmatprep.subr.mxu0 0.0
    %979 = vmatpush1.msra.mxu0 0.0
    %980 = vmatprep.subr.mxu0 0.0
    %981 = vmatpush1.msra.mxu0 0.0
    %982 = vmatprep.subr.mxu0 0.0
    %983 = vmatpush1.msra.mxu0 0.0
    %984 = vmatprep.subr.mxu0 0.0
    %985 = vmatpush1.msra.mxu0 0.0
    %986 = vmatprep.subr.mxu0 0.0
    %987 = vmatpush1.msra.mxu0 0.0
    %988 = vmatprep.subr.mxu0 0.0
    %989 = vmatpush1.msra.mxu0 0.0
    %990 = vmatprep.subr.mxu0 0.0
    %991 = vmatpush1.msra.mxu0 0.0
    %992 = vmatprep.subr.mxu0 0.0
    %993 = vmatpush1.msra.mxu0 0.0
    %994 = vmatprep.subr.mxu0 0.0
    %995 = vmatpush1.msra.mxu0 0.0
    %996 = vmatprep.mubr.f32.mxu0 0.0
    %997 = vmatmul.mubr.f32.gmra.mrb[0].mxu0 %v930
    %v998 = vpop.f32.mrb[0].mxu0
    %v999 = vadd.f32 0.0, %v998
    %v1000 = vpop.f32.mrb[0].mxu0
    %1001 = vdwg.mxu0
    %v1002 = vadd.f32 %v929, %v999
    %v1003 = vxor.u32 %v1002, 2147483648
    %v1004 = vmul.f32 %v1003, 1.442695
    %v1005 = vpow.pop %v1004
    %v1006 = vadd.f32 %v1005, 1.0
    %v1007 = vrcp.pop %v1006
    %v1008 = vmul.f32 1.0, %v1007
    %v1009 = vtanh.pop %v1002
    %v1010 = vmul.f32 %v1008, %v915
    %1012 = vrot.lane.b32.xlu0 %v1009, 64
    %v1013 = vpop.permute.xlu0 %1012
    %v1015 = vmul.f32 %v1008, %v1013
    %1017 = vrot.lane.b32.xlu0 %v1015, 32
    %v1018 = vpop.permute.xlu0 %1017
    %v1020 = vadd.f32 %v1010, %v1018
    %v1021 = vtanh.pop %v1020
    %1023 = vrot.lane.b32.xlu0 %v1021, 64
    %v1024 = vpop.permute.xlu0 %1023
    %v1026 = vmul.f32 %v1008, %v1024
    %1028 = vrot.lane.b32.xlu0 %v1026, 32
    %v1029 = vpop.permute.xlu0 %1028
    %s1031 = scalar_lea.vmem [#allocation3], 7
    %1032 = vst.msk [vmem:[%s1031] sm:$0x1] %vm296, %v1029
    %1033 = vst.msk [vmem:[#allocation4] sm:$0x1] %vm296, %v1029
    %1035 = vrot.lane.b32.xlu0 %v1020, 96
    %v1036 = vpop.permute.xlu0 %1035
    %1038 = vst.msk [vmem:[#allocation5] sm:$0x1] %vm296, %v1036
    %1039 = vst.msk [vmem:[#allocation15] sm:$0x1] %vm296, %v1029
    %1040 = vst.msk [vmem:[#allocation17] sm:$0x1] %vm296, %v1036
    %v1041 = vld [vmem:[#allocation3] sm:$0xff]
    %v1042 = vld [vmem:[#allocation12] sm:$0xff]
    %v1043 = vld [vmem:[#allocation12 + $0x8] sm:$0xff]
    %v1044 = vld [vmem:[#allocation12 + $0x10] sm:$0xff]
    %v1045 = vld [vmem:[#allocation12 + $0x18] sm:$0xff]
    %v1046 = vld [vmem:[%s5] sm:$0x1]
    %v1048 = vlaneseq
    %v1049 = vshrl.u32 %v1048, 7
    %v1050 = vsub.s32 0, %v1049
    %v1051 = vrot.slane %v1046, %v1050
    %v1054 = vsel %vm185, %v1041, 0
    %1056 = vmatprep.subr.mxu0 0.0
    %1057 = vmatpush1.msra.mxu0 %v1042
    %1058 = vmatprep.subr.mxu0 0.0
    %1059 = vmatpush1.msra.mxu0 %v1043
    %1060 = vmatprep.subr.mxu0 0.0
    %1061 = vmatpush1.msra.mxu0 %v1044
    %1062 = vmatprep.subr.mxu0 0.0
    %1063 = vmatpush1.msra.mxu0 %v1045
    %1064 = vmatprep.subr.mxu0 0.0
    %1065 = vmatpush1.msra.mxu0 0.0
    %1066 = vmatprep.subr.mxu0 0.0
    %1067 = vmatpush1.msra.mxu0 0.0
    %1068 = vmatprep.subr.mxu0 0.0
    %1069 = vmatpush1.msra.mxu0 0.0
    %1070 = vmatprep.subr.mxu0 0.0
    %1071 = vmatpush1.msra.mxu0 0.0
    %1072 = vmatprep.subr.mxu0 0.0
    %1073 = vmatpush1.msra.mxu0 0.0
    %1074 = vmatprep.subr.mxu0 0.0
    %1075 = vmatpush1.msra.mxu0 0.0
    %1076 = vmatprep.subr.mxu0 0.0
    %1077 = vmatpush1.msra.mxu0 0.0
    %1078 = vmatprep.subr.mxu0 0.0
    %1079 = vmatpush1.msra.mxu0 0.0
    %1080 = vmatprep.subr.mxu0 0.0
    %1081 = vmatpush1.msra.mxu0 0.0
    %1082 = vmatprep.subr.mxu0 0.0
    %1083 = vmatpush1.msra.mxu0 0.0
    %1084 = vmatprep.subr.mxu0 0.0
    %1085 = vmatpush1.msra.mxu0 0.0
    %1086 = vmatprep.subr.mxu0 0.0
    %1087 = vmatpush1.msra.mxu0 0.0
    %1088 = vmatprep.subr.mxu0 0.0
    %1089 = vmatpush1.msra.mxu0 0.0
    %1090 = vmatprep.subr.mxu0 0.0
    %1091 = vmatpush1.msra.mxu0 0.0
    %1092 = vmatprep.subr.mxu0 0.0
    %1093 = vmatpush1.msra.mxu0 0.0
    %1094 = vmatprep.subr.mxu0 0.0
    %1095 = vmatpush1.msra.mxu0 0.0
    %1096 = vmatprep.subr.mxu0 0.0
    %1097 = vmatpush1.msra.mxu0 0.0
    %1098 = vmatprep.subr.mxu0 0.0
    %1099 = vmatpush1.msra.mxu0 0.0
    %1100 = vmatprep.subr.mxu0 0.0
    %1101 = vmatpush1.msra.mxu0 0.0
    %1102 = vmatprep.subr.mxu0 0.0
    %1103 = vmatpush1.msra.mxu0 0.0
    %1104 = vmatprep.subr.mxu0 0.0
    %1105 = vmatpush1.msra.mxu0 0.0
    %1106 = vmatprep.subr.mxu0 0.0
    %1107 = vmatpush1.msra.mxu0 0.0
    %1108 = vmatprep.subr.mxu0 0.0
    %1109 = vmatpush1.msra.mxu0 0.0
    %1110 = vmatprep.subr.mxu0 0.0
    %1111 = vmatpush1.msra.mxu0 0.0
    %1112 = vmatprep.subr.mxu0 0.0
    %1113 = vmatpush1.msra.mxu0 0.0
    %1114 = vmatprep.subr.mxu0 0.0
    %1115 = vmatpush1.msra.mxu0 0.0
    %1116 = vmatprep.subr.mxu0 0.0
    %1117 = vmatpush1.msra.mxu0 0.0
    %1118 = vmatprep.subr.mxu0 0.0
    %1119 = vmatpush1.msra.mxu0 0.0
    %1120 = vmatprep.mubr.f32.mxu0 0.0
    %1121 = vmatmul.mubr.f32.gmra.mrb[0].mxu0 %v1054
    %v1122 = vpop.f32.mrb[0].mxu0
    %v1123 = vadd.f32 %v1051, %v1122
    %v1124 = vpop.f32.mrb[0].mxu0
    %1125 = vdwg.mxu0
    %1126 = vmax.xlane.f32.xlu0 %v1123
    %v1127 = vpop.xlane.xlu0 %1126
    %v1128 = vsub.f32 %v1123, %v1127
    %v1129 = vmul.f32 %v1128, 1.442695
    %v1130 = vpow.pop %v1129
    %1131 = vadd.xlane.f32.xlu0 %v1130
    %v1132 = vpop.xlane.xlu0 %1131
    %v1133 = vrcp.pop %v1132
    %v1134 = vmul.f32 %v1130, %v1133
    %1135 = vst [vmem:[#allocation14] sm:$0xff] %v1134
    // Predicated region
    $region46: #{tpu_custom_call.1} parent=1 // pred_check
      _
    $region47: #{tpu_custom_call.1} parent=1 // pred_check_branch
      %1137 = sbr.rel (0) target = $region49
    $region48: #{tpu_custom_call.1} parent=1 // pred_region
      %s1139 = ssub.s32 128, 128
      %1140 = vsyncadd [#allocation8], %s1139
      %s1142 = sshll.u32 [#allocation14], 4
      %s1143 = int_to_ptr.vmem [resolvable:$true] %s1142
      %1145 = dma.vmem_to_hbm [thread:$0]  %s1143, 128, %s6, [#allocation8]
    $region49: #{tpu_custom_call.1} parent=1 // pred_fallthru
      _
    // Predicated region
    $region50: #{tpu_custom_call.1} parent=1 // pred_check
      _
    $region51: #{tpu_custom_call.1} parent=1 // pred_check_branch
      %1147 = sbr.rel (0) target = $region53
    $region52: #{tpu_custom_call.1} parent=1 // pred_region
      %s1149 = ssub.s32 16, 16
      %1150 = vsyncadd [#allocation16], %s1149
      %s1152 = sshll.u32 [#allocation15], 4
      %s1153 = int_to_ptr.vmem [resolvable:$true] %s1152
      %1155 = dma.vmem_to_hbm [thread:$0]  %s1153, 16, %s7, [#allocation16]
    $region53: #{tpu_custom_call.1} parent=1 // pred_fallthru
      _
    // Predicated region
    $region54: #{tpu_custom_call.1} parent=1 // pred_check
      _
    $region55: #{tpu_custom_call.1} parent=1 // pred_check_branch
      %1157 = sbr.rel (0) target = $region57
    $region56: #{tpu_custom_call.1} parent=1 // pred_region
      %s1159 = ssub.s32 16, 16
      %1160 = vsyncadd [#allocation16], %s1159
      %s1162 = sshll.u32 [#allocation17], 4
      %s1163 = int_to_ptr.vmem [resolvable:$true] %s1162
      %1165 = dma.vmem_to_hbm [thread:$0]  %s1163, 16, %s8, [#allocation16]
    $region57: #{tpu_custom_call.1} parent=1 // pred_fallthru
      _
    // Predicated region
    $region58: #{tpu_custom_call.1} parent=1 // pred_check
      _
    $region59: #{tpu_custom_call.1} parent=1 // pred_check_branch
      %1167 = sbr.rel (0) target = $region61
    $region60: #{tpu_custom_call.1} parent=1 // pred_region
      %1168 = dma.done [#allocation8], 128
    $region61: #{tpu_custom_call.1} parent=1 // pred_fallthru
      _
    // Predicated region
    $region62: #{tpu_custom_call.1} parent=1 // pred_check
      _
    $region63: #{tpu_custom_call.1} parent=1 // pred_check_branch
      %1170 = sbr.rel (0) target = $region65
    $region64: #{tpu_custom_call.1} parent=1 // pred_region
      %1171 = dma.done [#allocation16], 16
    $region65: #{tpu_custom_call.1} parent=1 // pred_fallthru
      _
    // Predicated region
    $region66: #{tpu_custom_call.1} parent=1 // pred_check
      _
    $region67: #{tpu_custom_call.1} parent=1 // pred_check_branch
      %1173 = sbr.rel (0) target = $region69
    $region68: #{tpu_custom_call.1} parent=1 // pred_region
      %1174 = dma.done [#allocation16], 16
    $region69: #{tpu_custom_call.1} parent=1 // pred_fallthru
      _
    %1175 = vsyncpa [#allocation7], 1
    %1176 = vsyncpa [#allocation10], 1
    %1177 = vsyncpa [#allocation13], 1
    %1178 = vsyncpa [#allocation8], 1
    %1179 = vsyncpa [#allocation16], 1

</llo_original>
